<compile_context>
chip_gen: v7x
topology: tpu7x:2x2x1
jax: 0.10.0
libtpu: 0.0.40
codegen_flags: <defaults>
</compile_context>

<pallas_src>
import functools

import numpy as np

import jax
import jax.numpy as jnp
from jax import lax
from jax.experimental import pallas as pl
from jax.experimental.pallas import tpu as pltpu


# -----------------------------------------------------------------------------
# host-side constant builders (static shapes -> plain numpy)
# -----------------------------------------------------------------------------
def _span_len(H, W):
    """Length of the contiguous flat span covering all valid conv outputs."""
    return (H - 1) * (W + 2) + W


def _make_span_mask(H, W):
    """(1, L) 0/1 mask: 1 at valid output positions of the span, 0 at the
    'row wrap' positions that read across row boundaries."""
    Wp = W + 2
    L = _span_len(H, W)
    l = np.arange(L)
    return ((l % Wp) < W).astype(np.float32)[None, :]


def _make_sel_down(H, W):
    """(L, Hp2*Wp2) 0/1 matrix: stride-1 conv span at (H, W) -> stride-2
    subsampled output re-embedded in the zero-ring padded-flat layout at
    (H//2, W//2).  Implements the stride-2 conv as one tiny MXU op."""
    Wp = W + 2
    H2, W2 = H // 2, W // 2
    Wp2 = W2 + 2
    L = _span_len(H, W)
    S = np.zeros((L, (H2 + 2) * Wp2), np.float32)
    for i in range(H2):
        for j in range(W2):
            S[(2 * i) * Wp + 2 * j, (i + 1) * Wp2 + (j + 1)] = 1.0
    return S


def _make_avg_pool(H, W, d):
    """(H*W, H*W) matrix of the dilated 3x3 average pool with reflect padding
    (pad = d), acting on row-major (H, W) maps:  avg = feat @ A."""
    def refl(x, n):
        if x < 0:
            return -x
        if x >= n:
            return 2 * n - 2 - x
        return x

    A = np.zeros((H * W, H * W), np.float32)
    for i in range(H):
        for j in range(W):
            p = i * W + j
            for ki in (-1, 0, 1):
                for kj in (-1, 0, 1):
                    q = refl(i + ki * d, H) * W + refl(j + kj * d, W)
                    A[q, p] += 1.0 / 9.0
    return A


def _make_upsample(h, w, H, W):
    """(h*w, H*W) bilinear (align_corners=False / half-pixel) upsampling
    matrix with edge clamping:  up = score @ U."""
    def axis_mat(n_in, n_out):
        M = np.zeros((n_in, n_out), np.float32)
        scale = n_in / n_out
        for o in range(n_out):
            src = (o + 0.5) * scale - 0.5
            i0 = int(np.floor(src))
            f = src - i0
            a = min(max(i0, 0), n_in - 1)
            b = min(max(i0 + 1, 0), n_in - 1)
            M[a, o] += 1.0 - f
            M[b, o] += f
        return M

    return np.kron(axis_mat(h, H), axis_mat(w, W)).astype(np.float32)


# -----------------------------------------------------------------------------
# in-kernel helpers (operate on values, not refs)
# -----------------------------------------------------------------------------
def _im2col_dot(x_pad, wT, Wp, L):
    """x_pad: (Cin, Hp*Wp) padded-flat value with zero halo ring.
    wT: (Cout, 9*Cin) with tap-major / channel-minor ordering.
    Returns the stride-1 conv span (Cout, L) via a single MXU matmul."""
    taps = []
    for ki in range(3):
        for kj in range(3):
            start = ki * Wp + kj
            taps.append(x_pad[:, start:start + L])
    xcat = jnp.concatenate(taps, axis=0)                       # (9*Cin, L)
    return jnp.dot(wT, xcat, preferred_element_type=jnp.float32)


def _span_to_pad(span, mask, Wp, HpWp):
    """Re-embed a conv span (C, L) into the padded-flat layout (C, Hp*Wp):
    zero the row-wrap garbage with `mask` and add the zero halo ring."""
    C, L = span.shape
    q0 = Wp + 1
    body = span * mask
    left = jnp.zeros((C, q0), jnp.float32)
    right = jnp.zeros((C, HpWp - q0 - L), jnp.float32)
    return jnp.concatenate([left, body, right], axis=1)


def _span_to_valid(span, H, W):
    """Extract the valid (C, H*W) row-major map from a conv span (C, L)."""
    Wp = W + 2
    rows = [span[:, i * Wp: i * Wp + W] for i in range(H)]
    return jnp.concatenate(rows, axis=1)


def _softplus(x):
    return jnp.maximum(x, 0.0) + jnp.log1p(jnp.exp(-jnp.abs(x)))


def _peakiness(feat_valid, avg_mat, inv_mmax):
    """feat_valid: (C, H*W). Returns the channel-max peakiness score (1, H*W)."""
    f = feat_valid * inv_mmax
    avg_sp = jnp.dot(f, avg_mat, preferred_element_type=jnp.float32)  # (C, HW)
    avg_ch = jnp.mean(f, axis=0, keepdims=True)                       # (1, HW)
    alpha = _softplus(f - avg_sp)
    beta = _softplus(f - avg_ch)
    return jnp.max(alpha * beta, axis=0, keepdims=True)               # (1, HW)


# -----------------------------------------------------------------------------
# Pallas stage kernels (one fused kernel per resolution stage)
# -----------------------------------------------------------------------------
def _stage_a_kernel(x_ref, w0_ref, w1_ref, w1o_ref, mask_ref, avg1_ref,
                    x1a_ref, score1_ref, *, H, W, inv_mmax):
    Wp = W + 2
    HpWp = (H + 2) * Wp
    L = _span_len(H, W)
    x_in = x_ref[0]                                   # (1, HpWp)
    mask = mask_ref[...]                              # (1, L)

    # conv_bn0 (BN scale folded into weights) + relu
    s0 = _im2col_dot(x_in, w0_ref[...], Wp, L)
    x0 = jnp.maximum(_span_to_pad(s0, mask, Wp, HpWp), 0.0)

    # conv1 (output feeds both conv1_out and bn1/relu path)
    s1 = _im2col_dot(x0, w1_ref[...], Wp, L)
    x1_pad = _span_to_pad(s1, mask, Wp, HpWp)

    # conv1_out -> peakiness (dilation 3) at full res (no upsample needed)
    s1o = _im2col_dot(x1_pad, w1o_ref[...], Wp, L)
    feat1 = _span_to_valid(s1o, H, W)                 # (od0, H*W)
    score1_ref[0] = _peakiness(feat1, avg1_ref[...], inv_mmax)

    # bn1 (scale folded into the next conv's weights) + relu1
    x1a_ref[0] = jnp.maximum(x1_pad, 0.0)


def _stage_b_kernel(x_ref, w2_ref, w3_ref, w3o_ref, sel_ref, mask2_ref,
                    avg3_ref, up3_ref, x3a_ref, score3_ref, *, H, W, inv_mmax):
    Wp = W + 2
    L = _span_len(H, W)
    H2, W2 = H // 2, W // 2
    Wp2 = W2 + 2
    HpWp2 = (H2 + 2) * Wp2
    L2 = _span_len(H2, W2)
    x1a = x_ref[0]                                    # (c0, HpWp) full res
    mask2 = mask2_ref[...]

    # conv_bn2: stride-2 conv (bn1 + bn2 scales folded) + relu.
    # Stride-2 = stride-1 span followed by a 0/1 selection matmul that also
    # re-embeds into the half-res padded-flat layout (zero ring for free).
    s2 = _im2col_dot(x1a, w2_ref[...], Wp, L)                         # (c1, L)
    x2 = jnp.maximum(
        jnp.dot(s2, sel_ref[...], preferred_element_type=jnp.float32), 0.0)

    # conv3 (output feeds both conv3_out and bn3/relu path)
    s3 = _im2col_dot(x2, w3_ref[...], Wp2, L2)
    x3_pad = _span_to_pad(s3, mask2, Wp2, HpWp2)

    # conv3_out -> peakiness (dilation 2) -> bilinear upsample to full res
    s3o = _im2col_dot(x3_pad, w3o_ref[...], Wp2, L2)
    feat3 = _span_to_valid(s3o, H2, W2)
    score_small = _peakiness(feat3, avg3_ref[...], inv_mmax)          # (1, H2*W2)
    score3_ref[0] = jnp.dot(score_small, up3_ref[...],
                            preferred_element_type=jnp.float32)       # (1, H*W)

    # bn3 (scale folded downstream) + relu3
    x3a_ref[0] = jnp.maximum(x3_pad, 0.0)


def _stage_c_kernel(x_ref, w4_ref, w5_ref, w60_ref, w61_ref, w6_ref,
                    sel_ref, mask4_ref, avg6_ref, up6_ref,
                    feat6_ref, score6_ref, *, H2, W2, inv_mmax):
    Wp2 = W2 + 2
    L2 = _span_len(H2, W2)
    H4, W4 = H2 // 2, W2 // 2
    Wp4 = W4 + 2
    HpWp4 = (H4 + 2) * Wp4
    L4 = _span_len(H4, W4)
    x3a = x_ref[0]                                    # (c1, HpWp2) half res
    mask4 = mask4_ref[...]

    # conv_bn4: stride-2 conv (bn3 + bn4 scales folded) + relu
    s4 = _im2col_dot(x3a, w4_ref[...], Wp2, L2)
    x4 = jnp.maximum(
        jnp.dot(s4, sel_ref[...], preferred_element_type=jnp.float32), 0.0)

    # conv_bn5 / conv_bn6_0 / conv_bn6_1 (scales folded) + relu
    s5 = _im2col_dot(x4, w5_ref[...], Wp4, L4)
    x5 = jnp.maximum(_span_to_pad(s5, mask4, Wp4, HpWp4), 0.0)
    s60 = _im2col_dot(x5, w60_ref[...], Wp4, L4)
    x60 = jnp.maximum(_span_to_pad(s60, mask4, Wp4, HpWp4), 0.0)
    s61 = _im2col_dot(x60, w61_ref[...], Wp4, L4)
    x61 = jnp.maximum(_span_to_pad(s61, mask4, Wp4, HpWp4), 0.0)

    # conv6 -> dense feature map + peakiness (dilation 1) -> upsample
    s6 = _im2col_dot(x61, w6_ref[...], Wp4, L4)
    feat6 = _span_to_valid(s6, H4, W4)                # (od2, H4*W4)
    feat6_ref[0] = feat6
    score_small = _peakiness(feat6, avg6_ref[...], inv_mmax)
    score6_ref[0] = jnp.dot(score_small, up6_ref[...],
                            preferred_element_type=jnp.float32)


# -----------------------------------------------------------------------------
# pallas_call wrappers
# -----------------------------------------------------------------------------
def _stage_a_call(x_flat, w0, w1, w1o, mask, avg1, *, H, W, c0, od0, inv_mmax):
    B = x_flat.shape[0]
    HpWp = (H + 2) * (W + 2)
    L = _span_len(H, W)
    kern = functools.partial(_stage_a_kernel, H=H, W=W, inv_mmax=inv_mmax)
    return pl.pallas_call(
        kern,
        out_shape=(jax.ShapeDtypeStruct((B, c0, HpWp), jnp.float32),
                   jax.ShapeDtypeStruct((B, 1, H * W), jnp.float32)),
        grid=(B,),
        in_specs=[
            pl.BlockSpec((1, 1, HpWp), lambda b: (b, 0, 0)),
            pl.BlockSpec((c0, 9), lambda b: (0, 0)),
            pl.BlockSpec((c0, 9 * c0), lambda b: (0, 0)),
            pl.BlockSpec((od0, 9 * c0), lambda b: (0, 0)),
            pl.BlockSpec((1, L), lambda b: (0, 0)),
            pl.BlockSpec((H * W, H * W), lambda b: (0, 0)),
        ],
        out_specs=(
            pl.BlockSpec((1, c0, HpWp), lambda b: (b, 0, 0)),
            pl.BlockSpec((1, 1, H * W), lambda b: (b, 0, 0)),
        ),
        compiler_params=pltpu.CompilerParams(dimension_semantics=("parallel",)),
    )(x_flat, w0, w1, w1o, mask, avg1)


def _stage_b_call(x1a, w2, w3, w3o, sel, mask2, avg3, up3, *,
                  H, W, c1, od1, inv_mmax):
    B = x1a.shape[0]
    c0 = x1a.shape[1]
    HpWp = (H + 2) * (W + 2)
    L = _span_len(H, W)
    H2, W2 = H // 2, W // 2
    HpWp2 = (H2 + 2) * (W2 + 2)
    L2 = _span_len(H2, W2)
    kern = functools.partial(_stage_b_kernel, H=H, W=W, inv_mmax=inv_mmax)
    return pl.pallas_call(
        kern,
        out_shape=(jax.ShapeDtypeStruct((B, c1, HpWp2), jnp.float32),
                   jax.ShapeDtypeStruct((B, 1, H * W), jnp.float32)),
        grid=(B,),
        in_specs=[
            pl.BlockSpec((1, c0, HpWp), lambda b: (b, 0, 0)),
            pl.BlockSpec((c1, 9 * c0), lambda b: (0, 0)),
            pl.BlockSpec((c1, 9 * c1), lambda b: (0, 0)),
            pl.BlockSpec((od1, 9 * c1), lambda b: (0, 0)),
            pl.BlockSpec((L, HpWp2), lambda b: (0, 0)),
            pl.BlockSpec((1, L2), lambda b: (0, 0)),
            pl.BlockSpec((H2 * W2, H2 * W2), lambda b: (0, 0)),
            pl.BlockSpec((H2 * W2, H * W), lambda b: (0, 0)),
        ],
        out_specs=(
            pl.BlockSpec((1, c1, HpWp2), lambda b: (b, 0, 0)),
            pl.BlockSpec((1, 1, H * W), lambda b: (b, 0, 0)),
        ),
        compiler_params=pltpu.CompilerParams(dimension_semantics=("parallel",)),
    )(x1a, w2, w3, w3o, sel, mask2, avg3, up3)


def _stage_c_call(x3a, w4, w5, w60, w61, w6, sel, mask4, avg6, up6, *,
                  H2, W2, c2, od2, inv_mmax):
    B = x3a.shape[0]
    c1 = x3a.shape[1]
    HpWp2 = (H2 + 2) * (W2 + 2)
    L2 = _span_len(H2, W2)
    H4, W4 = H2 // 2, W2 // 2
    HpWp4 = (H4 + 2) * (W4 + 2)
    L4 = _span_len(H4, W4)
    HWfull = up6.shape[1]
    kern = functools.partial(_stage_c_kernel, H2=H2, W2=W2, inv_mmax=inv_mmax)
    return pl.pallas_call(
        kern,
        out_shape=(jax.ShapeDtypeStruct((B, od2, H4 * W4), jnp.float32),
                   jax.ShapeDtypeStruct((B, 1, HWfull), jnp.float32)),
        grid=(B,),
        in_specs=[
            pl.BlockSpec((1, c1, HpWp2), lambda b: (b, 0, 0)),
            pl.BlockSpec((c2, 9 * c1), lambda b: (0, 0)),
            pl.BlockSpec((c2, 9 * c2), lambda b: (0, 0)),
            pl.BlockSpec((c2, 9 * c2), lambda b: (0, 0)),
            pl.BlockSpec((c2, 9 * c2), lambda b: (0, 0)),
            pl.BlockSpec((od2, 9 * c2), lambda b: (0, 0)),
            pl.BlockSpec((L2, HpWp4), lambda b: (0, 0)),
            pl.BlockSpec((1, L4), lambda b: (0, 0)),
            pl.BlockSpec((H4 * W4, H4 * W4), lambda b: (0, 0)),
            pl.BlockSpec((H4 * W4, HWfull), lambda b: (0, 0)),
        ],
        out_specs=(
            pl.BlockSpec((1, od2, H4 * W4), lambda b: (b, 0, 0)),
            pl.BlockSpec((1, 1, HWfull), lambda b: (b, 0, 0)),
        ),
        compiler_params=pltpu.CompilerParams(dimension_semantics=("parallel",)),
    )(x3a, w4, w5, w60, w61, w6, sel, mask4, avg6, up6)


# -----------------------------------------------------------------------------
# plain-JAX glue (keypoint extraction, descriptor sampling) -- tiny, not hot
# -----------------------------------------------------------------------------
def extract_kpts(score_map, k, score_thld, nms_size):
    """score_map: [B,H,W,1]. Fixed-k top_k instead of dynamic masked argsort."""
    B, H, W, _ = score_map.shape
    sm = score_map[..., 0]
    mask = sm > score_thld
    if nms_size > 0:
        nms = lax.reduce_window(sm, -jnp.inf, lax.max,
                                (1, nms_size, nms_size), (1, 1, 1), "SAME")
        mask = jnp.logical_and(mask, sm == nms)
    masked = jnp.where(mask, sm, -jnp.inf)
    scores, idx = lax.top_k(masked.reshape(B, H * W), k)
    inds = jnp.stack([idx // W, idx % W], axis=-1)                     # (row, col)
    return inds, scores


def bilinear_sample(coords_ij, feat):
    """coords_ij: [B,K,2] float (row, col) in feat pixel units; feat: [B,Hf,Wf,C]."""
    B, Hf, Wf, C = feat.shape
    i = jnp.clip(coords_ij[..., 0], 0.0, Hf - 1.0)
    j = jnp.clip(coords_ij[..., 1], 0.0, Wf - 1.0)
    i0 = jnp.floor(i).astype(jnp.int32)
    j0 = jnp.floor(j).astype(jnp.int32)
    i1 = jnp.minimum(i0 + 1, Hf - 1)
    j1 = jnp.minimum(j0 + 1, Wf - 1)
    di = (i - i0.astype(jnp.float32))[..., None]
    dj = (j - j0.astype(jnp.float32))[..., None]

    def gather(ii, jj):
        return jax.vmap(lambda f, a, b: f[a, b])(feat, ii, jj)         # [B,K,C]

    f00, f01 = gather(i0, j0), gather(i0, j1)
    f10, f11 = gather(i1, j0), gather(i1, j1)
    return (f00 * (1 - di) * (1 - dj) + f01 * (1 - di) * dj +
            f10 * di * (1 - dj) + f11 * di * dj)                       # [B,K,C]


# -----------------------------------------------------------------------------
# model
# -----------------------------------------------------------------------------
CONFIG = {
    "is_training": False,
    "network": {
        "det": {"weight": 1.0, "kpt_n": 16, "multi_level": True,
                "score_thld": 0.0, "edge_thld": 0, "nms_size": 3,
                "eof_mask": 0, "kpt_refinement": False, "norm_type": 2},
        "e2cnn": {"nbr_rotations": 4, "feat_dim": [2, 2, 4],
                  "out_dim": [4, 4, 8], "group_pool": False},
    },
}


def _xavier(key, shape):
    fan_in = shape[0] * shape[1] * shape[2]
    fan_out = shape[0] * shape[1] * shape[3]
    limit = (6.0 / (fan_in + fan_out)) ** 0.5
    return jax.random.uniform(key, shape, jnp.float32, -limit, limit)


def _fold_wT(w_hwio, cin_scale=None, cout_scale=None):
    """(3,3,Cin,Cout) -> (Cout, 9*Cin), tap-major / channel-minor, with the
    eval-mode BN scales folded in (per input and/or output channel)."""
    w = w_hwio
    if cin_scale is not None:
        w = w * cin_scale[None, None, :, None]
    if cout_scale is not None:
        w = w * cout_scale[None, None, None, :]
    cin, cout = w.shape[2], w.shape[3]
    return jnp.transpose(w, (3, 0, 1, 2)).reshape(cout, 9 * cin)


class BaseNetPallas:
    def __init__(self, config, epsilon=1e-5):
        self.det = config["network"]["det"]
        e2 = config["network"]["e2cnn"]
        N = e2["nbr_rotations"]
        fd, od = e2["feat_dim"], e2["out_dim"]
        self.c0, self.c1, self.c2 = fd[0] * N, fd[1] * N, fd[2] * N
        self.od = od
        self.eps = epsilon
        self.moving_instance_max = {"conv1": 1.0, "conv3": 1.0, "conv6": 1.0}

        key = jax.random.PRNGKey(42)
        ks = jax.random.split(key, 11)
        c0, c1, c2 = self.c0, self.c1, self.c2
        raw = {
            "w0":  _xavier(ks[0],  (3, 3, 1,  c0)),
            "w1":  _xavier(ks[1],  (3, 3, c0, c0)),
            "w1o": _xavier(ks[2],  (3, 3, c0, od[0])),
            "w2":  _xavier(ks[3],  (3, 3, c0, c1)),
            "w3":  _xavier(ks[4],  (3, 3, c1, c1)),
            "w3o": _xavier(ks[5],  (3, 3, c1, od[1])),
            "w4":  _xavier(ks[6],  (3, 3, c1, c2)),
            "w5":  _xavier(ks[7],  (3, 3, c2, c2)),
            "w60": _xavier(ks[8],  (3, 3, c2, c2)),
            "w61": _xavier(ks[9],  (3, 3, c2, c2)),
            "w6":  _xavier(ks[10], (3, 3, c2, od[2])),
        }
        # eval-mode InnerBatchNorm (affine=False, running mean=0 / var=1):
        # per-channel scale 1/sqrt(1+eps), folded into the conv weights.
        s = lambda c: jnp.full((c,), (1.0 + epsilon) ** -0.5, jnp.float32)
        self.w = {
            "w0":  _fold_wT(raw["w0"], cout_scale=s(c0)),                    # conv_bn0
            "w1":  _fold_wT(raw["w1"]),                                      # conv1
            "w1o": _fold_wT(raw["w1o"]),                                     # conv1_out
            "w2":  _fold_wT(raw["w2"], cin_scale=s(c0), cout_scale=s(c1)),   # bn1+conv_bn2
            "w3":  _fold_wT(raw["w3"]),                                      # conv3
            "w3o": _fold_wT(raw["w3o"]),                                     # conv3_out
            "w4":  _fold_wT(raw["w4"], cin_scale=s(c1), cout_scale=s(c2)),   # bn3+conv_bn4
            "w5":  _fold_wT(raw["w5"], cout_scale=s(c2)),                    # conv_bn5
            "w60": _fold_wT(raw["w60"], cout_scale=s(c2)),                   # conv_bn6_0
            "w61": _fold_wT(raw["w61"], cout_scale=s(c2)),                   # conv_bn6_1
            "w6":  _fold_wT(raw["w6"]),                                      # conv6
        }

    def __call__(self, x_nchw):
        if x_nchw.ndim == 3:
            x_nchw = x_nchw[:, None]
        B, _, H, W = x_nchw.shape
        assert H % 4 == 0 and W % 4 == 0, "spatial dims must be multiples of 4"
        H2, W2, H4, W4 = H // 2, W // 2, H // 4, W // 4

        # layout / detector constants (static shapes -> numpy, built once per call)
        mask1 = jnp.asarray(_make_span_mask(H, W))
        mask2 = jnp.asarray(_make_span_mask(H2, W2))
        mask4 = jnp.asarray(_make_span_mask(H4, W4))
        sel1 = jnp.asarray(_make_sel_down(H, W))
        sel2 = jnp.asarray(_make_sel_down(H2, W2))
        avg1 = jnp.asarray(_make_avg_pool(H, W, 3))
        avg3 = jnp.asarray(_make_avg_pool(H2, W2, 2))
        avg6 = jnp.asarray(_make_avg_pool(H4, W4, 1))
        up3 = jnp.asarray(_make_upsample(H2, W2, H, W))
        up6 = jnp.asarray(_make_upsample(H4, W4, H, W))

        # single host-side pad of the 1-channel input into the padded-flat layout
        xp = jnp.pad(x_nchw.astype(jnp.float32), ((0, 0), (0, 0), (1, 1), (1, 1)))
        x_flat = xp.reshape(B, 1, (H + 2) * (W + 2))

        w = self.w
        x1a, score1 = _stage_a_call(
            x_flat, w["w0"], w["w1"], w["w1o"], mask1, avg1,
            H=H, W=W, c0=self.c0, od0=self.od[0],
            inv_mmax=1.0 / self.moving_instance_max["conv1"])
        x3a, score3 = _stage_b_call(
            x1a, w["w2"], w["w3"], w["w3o"], sel1, mask2, avg3, up3,
            H=H, W=W, c1=self.c1, od1=self.od[1],
            inv_mmax=1.0 / self.moving_instance_max["conv3"])
        feat6, score6 = _stage_c_call(
            x3a, w["w4"], w["w5"], w["w60"], w["w61"], w["w6"],
            sel2, mask4, avg6, up6,
            H2=H2, W2=W2, c2=self.c2, od2=self.od[2],
            inv_mmax=1.0 / self.moving_instance_max["conv6"])

        # ---------------- detector head glue (tiny tensors) ----------------
        cw = jnp.array([1.0, 2.0, 3.0], jnp.float32)
        cw = cw / jnp.sum(cw)
        score_sum = cw[0] * score1 + cw[1] * score3 + cw[2] * score6    # (B,1,H*W)
        score_map = score_sum.reshape(B, H, W)[..., None]               # (B,H,W,1)

        inds, scores = extract_kpts(score_map, self.det["kpt_n"],
                                    self.det["score_thld"], self.det["nms_size"])
        det_kpt_inds = inds.astype(jnp.float32)                         # (row, col)
        det_kpt_coords = jnp.stack([det_kpt_inds[..., 1],
                                    det_kpt_inds[..., 0]], axis=-1)     # (x, y)

        # inference branch: L2-normalised descriptors sampled from conv6 (stride 4)
        feat6_nhwc = jnp.transpose(feat6.reshape(B, self.od[2], H4, W4),
                                   (0, 2, 3, 1))                        # (B,H4,W4,C)
        feats = bilinear_sample(det_kpt_inds / 4.0, feat6_nhwc)         # (B,K,C)
        feats = jnp.transpose(feats, (0, 2, 1))                         # (B,C,K)
        norm = jnp.sqrt(jnp.sum(feats * feats, axis=1, keepdims=True))
        descs = feats / jnp.maximum(norm, 1e-12)

        return det_kpt_coords, descs, scores


if __name__ == "__main__":
    key = jax.random.PRNGKey(0)
    x = jax.random.normal(key, (2, 1, 16, 16), jnp.float32)   # NCHW, trivial field
    model = BaseNetPallas(CONFIG)
    coords, descs, scores = model(x)
    jax.block_until_ready((coords, descs, scores))
    assert coords.shape == (2, 16, 2)
    assert descs.shape == (2, 8, 16)
    assert scores.shape == (2, 16)
    print("KERNEL_OK")
</pallas_src>

<mosaic_0001>
module attributes {stable_mosaic.version = 11 : i64} {
  func.func @_stage_a_kernel(%arg0: i32, %arg1: memref<1x1x324xf32, #tpu.memory_space<vmem>>, %arg2: memref<8x9xf32, #tpu.memory_space<vmem>>, %arg3: memref<8x72xf32, #tpu.memory_space<vmem>>, %arg4: memref<4x72xf32, #tpu.memory_space<vmem>>, %arg5: memref<1x286xf32, #tpu.memory_space<vmem>>, %arg6: memref<256x256xf32, #tpu.memory_space<vmem>>, %arg7: memref<1x8x324xf32, #tpu.memory_space<vmem>>, %arg8: memref<1x1x256xf32, #tpu.memory_space<vmem>>) attributes {dimension_semantics = [#tpu.dimension_semantics<parallel>], iteration_bounds = array<i64: 2>, scalar_prefetch = 0 : i64, scratch_operands = 0 : i64, tpu.core_type = #tpu.core_type<tc>, window_params = [{transform_indices = @transform_0, window_bounds = array<i64: 1, 1, 324>}, {pipeline_mode = #tpu.pipeline_mode<synchronous>, transform_indices = @transform_1, window_bounds = array<i64: 8, 9>}, {pipeline_mode = #tpu.pipeline_mode<synchronous>, transform_indices = @transform_2, window_bounds = array<i64: 8, 72>}, {pipeline_mode = #tpu.pipeline_mode<synchronous>, transform_indices = @transform_3, window_bounds = array<i64: 4, 72>}, {pipeline_mode = #tpu.pipeline_mode<synchronous>, transform_indices = @transform_4, window_bounds = array<i64: 1, 286>}, {pipeline_mode = #tpu.pipeline_mode<synchronous>, transform_indices = @transform_5, window_bounds = array<i64: 256, 256>}, {transform_indices = @transform_6, window_bounds = array<i64: 1, 8, 324>}, {transform_indices = @transform_7, window_bounds = array<i64: 1, 1, 256>}]} {
    %c0 = arith.constant 0 : index
    %c0_0 = arith.constant 0 : index
    %c0_1 = arith.constant 0 : index
    %0 = vector.load %arg1[%c0, %c0_0, %c0_1] : memref<1x1x324xf32, #tpu.memory_space<vmem>>, vector<1x1x324xf32>
    %1 = vector.shape_cast %0 : vector<1x1x324xf32> to vector<1x324xf32>
    %c0_2 = arith.constant 0 : index
    %c0_3 = arith.constant 0 : index
    %2 = vector.load %arg5[%c0_2, %c0_3] : memref<1x286xf32, #tpu.memory_space<vmem>>, vector<1x286xf32>
    %c0_4 = arith.constant 0 : index
    %c0_5 = arith.constant 0 : index
    %3 = vector.load %arg2[%c0_4, %c0_5] : memref<8x9xf32, #tpu.memory_space<vmem>>, vector<8x9xf32>
    %4 = vector.extract_strided_slice %1 {offsets = [0, 0], sizes = [1, 286], strides = [1, 1]} : vector<1x324xf32> to vector<1x286xf32>
    %5 = vector.extract_strided_slice %1 {offsets = [0, 1], sizes = [1, 286], strides = [1, 1]} : vector<1x324xf32> to vector<1x286xf32>
    %6 = vector.extract_strided_slice %1 {offsets = [0, 2], sizes = [1, 286], strides = [1, 1]} : vector<1x324xf32> to vector<1x286xf32>
    %7 = vector.extract_strided_slice %1 {offsets = [0, 18], sizes = [1, 286], strides = [1, 1]} : vector<1x324xf32> to vector<1x286xf32>
    %8 = vector.extract_strided_slice %1 {offsets = [0, 19], sizes = [1, 286], strides = [1, 1]} : vector<1x324xf32> to vector<1x286xf32>
    %9 = vector.extract_strided_slice %1 {offsets = [0, 20], sizes = [1, 286], strides = [1, 1]} : vector<1x324xf32> to vector<1x286xf32>
    %10 = vector.extract_strided_slice %1 {offsets = [0, 36], sizes = [1, 286], strides = [1, 1]} : vector<1x324xf32> to vector<1x286xf32>
    %11 = vector.extract_strided_slice %1 {offsets = [0, 37], sizes = [1, 286], strides = [1, 1]} : vector<1x324xf32> to vector<1x286xf32>
    %12 = vector.extract_strided_slice %1 {offsets = [0, 38], sizes = [1, 286], strides = [1, 1]} : vector<1x324xf32> to vector<1x286xf32>
    %13 = tpu.concatenate %4, %5, %6, %7, %8, %9, %10, %11, %12 in 0 : vector<1x286xf32>, vector<1x286xf32>, vector<1x286xf32>, vector<1x286xf32>, vector<1x286xf32>, vector<1x286xf32>, vector<1x286xf32>, vector<1x286xf32>, vector<1x286xf32> -> vector<9x286xf32>
    %cst = arith.constant dense<0.000000e+00> : vector<8x286xf32>
    %14 = tpu.matmul %3, %13, %cst {dimension_numbers = #tpu.dot_dimension_numbers<[1], [0], [0], [1], [0, 0, 1, 1], [], []>} : vector<8x9xf32>, vector<9x286xf32>, vector<8x286xf32> -> vector<8x286xf32>
    %15 = vector.broadcast %2 : vector<1x286xf32> to vector<8x286xf32>
    %16 = arith.mulf %14, %15 : vector<8x286xf32>
    %cst_6 = arith.constant 0.000000e+00 : f32
    %17 = vector.broadcast %cst_6 : f32 to vector<8x19xf32>
    %cst_7 = arith.constant 0.000000e+00 : f32
    %18 = vector.broadcast %cst_7 : f32 to vector<8x19xf32>
    %19 = tpu.concatenate %17, %16, %18 in 1 : vector<8x19xf32>, vector<8x286xf32>, vector<8x19xf32> -> vector<8x324xf32>
    %cst_8 = arith.constant 0.000000e+00 : f32
    %20 = vector.broadcast %cst_8 : f32 to vector<8x324xf32>
    %21 = arith.maximumf %19, %20 : vector<8x324xf32>
    %c0_9 = arith.constant 0 : index
    %c0_10 = arith.constant 0 : index
    %22 = vector.load %arg3[%c0_9, %c0_10] : memref<8x72xf32, #tpu.memory_space<vmem>>, vector<8x72xf32>
    %23 = vector.extract_strided_slice %21 {offsets = [0, 0], sizes = [8, 286], strides = [1, 1]} : vector<8x324xf32> to vector<8x286xf32>
    %24 = vector.extract_strided_slice %21 {offsets = [0, 1], sizes = [8, 286], strides = [1, 1]} : vector<8x324xf32> to vector<8x286xf32>
    %25 = vector.extract_strided_slice %21 {offsets = [0, 2], sizes = [8, 286], strides = [1, 1]} : vector<8x324xf32> to vector<8x286xf32>
    %26 = vector.extract_strided_slice %21 {offsets = [0, 18], sizes = [8, 286], strides = [1, 1]} : vector<8x324xf32> to vector<8x286xf32>
    %27 = vector.extract_strided_slice %21 {offsets = [0, 19], sizes = [8, 286], strides = [1, 1]} : vector<8x324xf32> to vector<8x286xf32>
    %28 = vector.extract_strided_slice %21 {offsets = [0, 20], sizes = [8, 286], strides = [1, 1]} : vector<8x324xf32> to vector<8x286xf32>
    %29 = vector.extract_strided_slice %21 {offsets = [0, 36], sizes = [8, 286], strides = [1, 1]} : vector<8x324xf32> to vector<8x286xf32>
    %30 = vector.extract_strided_slice %21 {offsets = [0, 37], sizes = [8, 286], strides = [1, 1]} : vector<8x324xf32> to vector<8x286xf32>
    %31 = vector.extract_strided_slice %21 {offsets = [0, 38], sizes = [8, 286], strides = [1, 1]} : vector<8x324xf32> to vector<8x286xf32>
    %32 = tpu.concatenate %23, %24, %25, %26, %27, %28, %29, %30, %31 in 0 : vector<8x286xf32>, vector<8x286xf32>, vector<8x286xf32>, vector<8x286xf32>, vector<8x286xf32>, vector<8x286xf32>, vector<8x286xf32>, vector<8x286xf32>, vector<8x286xf32> -> vector<72x286xf32>
    %cst_11 = arith.constant dense<0.000000e+00> : vector<8x286xf32>
    %33 = tpu.matmul %22, %32, %cst_11 {dimension_numbers = #tpu.dot_dimension_numbers<[1], [0], [0], [1], [0, 0, 1, 1], [], []>} : vector<8x72xf32>, vector<72x286xf32>, vector<8x286xf32> -> vector<8x286xf32>
    %34 = vector.broadcast %2 : vector<1x286xf32> to vector<8x286xf32>
    %35 = arith.mulf %33, %34 : vector<8x286xf32>
    %cst_12 = arith.constant 0.000000e+00 : f32
    %36 = vector.broadcast %cst_12 : f32 to vector<8x19xf32>
    %cst_13 = arith.constant 0.000000e+00 : f32
    %37 = vector.broadcast %cst_13 : f32 to vector<8x19xf32>
    %38 = tpu.concatenate %36, %35, %37 in 1 : vector<8x19xf32>, vector<8x286xf32>, vector<8x19xf32> -> vector<8x324xf32>
    %c0_14 = arith.constant 0 : index
    %c0_15 = arith.constant 0 : index
    %39 = vector.load %arg4[%c0_14, %c0_15] : memref<4x72xf32, #tpu.memory_space<vmem>>, vector<4x72xf32>
    %40 = vector.extract_strided_slice %38 {offsets = [0, 0], sizes = [8, 286], strides = [1, 1]} : vector<8x324xf32> to vector<8x286xf32>
    %41 = vector.extract_strided_slice %38 {offsets = [0, 1], sizes = [8, 286], strides = [1, 1]} : vector<8x324xf32> to vector<8x286xf32>
    %42 = vector.extract_strided_slice %38 {offsets = [0, 2], sizes = [8, 286], strides = [1, 1]} : vector<8x324xf32> to vector<8x286xf32>
    %43 = vector.extract_strided_slice %38 {offsets = [0, 18], sizes = [8, 286], strides = [1, 1]} : vector<8x324xf32> to vector<8x286xf32>
    %44 = vector.extract_strided_slice %38 {offsets = [0, 19], sizes = [8, 286], strides = [1, 1]} : vector<8x324xf32> to vector<8x286xf32>
    %45 = vector.extract_strided_slice %38 {offsets = [0, 20], sizes = [8, 286], strides = [1, 1]} : vector<8x324xf32> to vector<8x286xf32>
    %46 = vector.extract_strided_slice %38 {offsets = [0, 36], sizes = [8, 286], strides = [1, 1]} : vector<8x324xf32> to vector<8x286xf32>
    %47 = vector.extract_strided_slice %38 {offsets = [0, 37], sizes = [8, 286], strides = [1, 1]} : vector<8x324xf32> to vector<8x286xf32>
    %48 = vector.extract_strided_slice %38 {offsets = [0, 38], sizes = [8, 286], strides = [1, 1]} : vector<8x324xf32> to vector<8x286xf32>
    %49 = tpu.concatenate %40, %41, %42, %43, %44, %45, %46, %47, %48 in 0 : vector<8x286xf32>, vector<8x286xf32>, vector<8x286xf32>, vector<8x286xf32>, vector<8x286xf32>, vector<8x286xf32>, vector<8x286xf32>, vector<8x286xf32>, vector<8x286xf32> -> vector<72x286xf32>
    %cst_16 = arith.constant dense<0.000000e+00> : vector<4x286xf32>
    %50 = tpu.matmul %39, %49, %cst_16 {dimension_numbers = #tpu.dot_dimension_numbers<[1], [0], [0], [1], [0, 0, 1, 1], [], []>} : vector<4x72xf32>, vector<72x286xf32>, vector<4x286xf32> -> vector<4x286xf32>
    %51 = vector.extract_strided_slice %50 {offsets = [0, 0], sizes = [4, 16], strides = [1, 1]} : vector<4x286xf32> to vector<4x16xf32>
    %52 = vector.extract_strided_slice %50 {offsets = [0, 18], sizes = [4, 16], strides = [1, 1]} : vector<4x286xf32> to vector<4x16xf32>
    %53 = vector.extract_strided_slice %50 {offsets = [0, 36], sizes = [4, 16], strides = [1, 1]} : vector<4x286xf32> to vector<4x16xf32>
    %54 = vector.extract_strided_slice %50 {offsets = [0, 54], sizes = [4, 16], strides = [1, 1]} : vector<4x286xf32> to vector<4x16xf32>
    %55 = vector.extract_strided_slice %50 {offsets = [0, 72], sizes = [4, 16], strides = [1, 1]} : vector<4x286xf32> to vector<4x16xf32>
    %56 = vector.extract_strided_slice %50 {offsets = [0, 90], sizes = [4, 16], strides = [1, 1]} : vector<4x286xf32> to vector<4x16xf32>
    %57 = vector.extract_strided_slice %50 {offsets = [0, 108], sizes = [4, 16], strides = [1, 1]} : vector<4x286xf32> to vector<4x16xf32>
    %58 = vector.extract_strided_slice %50 {offsets = [0, 126], sizes = [4, 16], strides = [1, 1]} : vector<4x286xf32> to vector<4x16xf32>
    %59 = vector.extract_strided_slice %50 {offsets = [0, 144], sizes = [4, 16], strides = [1, 1]} : vector<4x286xf32> to vector<4x16xf32>
    %60 = vector.extract_strided_slice %50 {offsets = [0, 162], sizes = [4, 16], strides = [1, 1]} : vector<4x286xf32> to vector<4x16xf32>
    %61 = vector.extract_strided_slice %50 {offsets = [0, 180], sizes = [4, 16], strides = [1, 1]} : vector<4x286xf32> to vector<4x16xf32>
    %62 = vector.extract_strided_slice %50 {offsets = [0, 198], sizes = [4, 16], strides = [1, 1]} : vector<4x286xf32> to vector<4x16xf32>
    %63 = vector.extract_strided_slice %50 {offsets = [0, 216], sizes = [4, 16], strides = [1, 1]} : vector<4x286xf32> to vector<4x16xf32>
    %64 = vector.extract_strided_slice %50 {offsets = [0, 234], sizes = [4, 16], strides = [1, 1]} : vector<4x286xf32> to vector<4x16xf32>
    %65 = vector.extract_strided_slice %50 {offsets = [0, 252], sizes = [4, 16], strides = [1, 1]} : vector<4x286xf32> to vector<4x16xf32>
    %66 = vector.extract_strided_slice %50 {offsets = [0, 270], sizes = [4, 16], strides = [1, 1]} : vector<4x286xf32> to vector<4x16xf32>
    %67 = tpu.concatenate %51, %52, %53, %54, %55, %56, %57, %58, %59, %60, %61, %62, %63, %64, %65, %66 in 1 : vector<4x16xf32>, vector<4x16xf32>, vector<4x16xf32>, vector<4x16xf32>, vector<4x16xf32>, vector<4x16xf32>, vector<4x16xf32>, vector<4x16xf32>, vector<4x16xf32>, vector<4x16xf32>, vector<4x16xf32>, vector<4x16xf32>, vector<4x16xf32>, vector<4x16xf32>, vector<4x16xf32>, vector<4x16xf32> -> vector<4x256xf32>
    %c0_17 = arith.constant 0 : index
    %c0_18 = arith.constant 0 : index
    %68 = vector.load %arg6[%c0_17, %c0_18] : memref<256x256xf32, #tpu.memory_space<vmem>>, vector<256x256xf32>
    %cst_19 = arith.constant 1.000000e+00 : f32
    %69 = vector.broadcast %cst_19 : f32 to vector<4x256xf32>
    %70 = arith.mulf %67, %69 : vector<4x256xf32>
    %cst_20 = arith.constant dense<0.000000e+00> : vector<4x256xf32>
    %71 = tpu.matmul %70, %68, %cst_20 {dimension_numbers = #tpu.dot_dimension_numbers<[1], [0], [0], [1], [0, 0, 1, 1], [], []>} : vector<4x256xf32>, vector<256x256xf32>, vector<4x256xf32> -> vector<4x256xf32>
    %cst_21 = arith.constant dense<0.000000e+00> : vector<256xf32>
    %72 = vector.multi_reduction <add>, %70, %cst_21 [0] : vector<4x256xf32> to vector<256xf32>
    %73 = vector.shape_cast %72 : vector<256xf32> to vector<1x256xf32>
    %cst_22 = arith.constant 4.000000e+00 : f32
    %74 = vector.broadcast %cst_22 : f32 to vector<1x256xf32>
    %75 = arith.divf %73, %74 : vector<1x256xf32>
    %76 = arith.subf %70, %71 : vector<4x256xf32>
    %cst_23 = arith.constant 0.000000e+00 : f32
    %77 = vector.broadcast %cst_23 : f32 to vector<4x256xf32>
    %78 = arith.maximumf %76, %77 : vector<4x256xf32>
    %79 = math.absf %76 : vector<4x256xf32>
    %cst_24 = arith.constant 0.000000e+00 : f32
    %80 = vector.broadcast %cst_24 : f32 to vector<4x256xf32>
    %81 = arith.subf %80, %79 : vector<4x256xf32>
    %82 = math.exp %81 : vector<4x256xf32>
    %83 = math.log1p %82 : vector<4x256xf32>
    %84 = arith.addf %78, %83 : vector<4x256xf32>
    %85 = vector.broadcast %75 : vector<1x256xf32> to vector<4x256xf32>
    %86 = arith.subf %70, %85 : vector<4x256xf32>
    %cst_25 = arith.constant 0.000000e+00 : f32
    %87 = vector.broadcast %cst_25 : f32 to vector<4x256xf32>
    %88 = arith.maximumf %86, %87 : vector<4x256xf32>
    %89 = math.absf %86 : vector<4x256xf32>
    %cst_26 = arith.constant 0.000000e+00 : f32
    %90 = vector.broadcast %cst_26 : f32 to vector<4x256xf32>
    %91 = arith.subf %90, %89 : vector<4x256xf32>
    %92 = math.exp %91 : vector<4x256xf32>
    %93 = math.log1p %92 : vector<4x256xf32>
    %94 = arith.addf %88, %93 : vector<4x256xf32>
    %95 = arith.mulf %84, %94 : vector<4x256xf32>
    %cst_27 = arith.constant dense<0xFF800000> : vector<256xf32>
    %96 = vector.multi_reduction <maximumf>, %95, %cst_27 [0] : vector<4x256xf32> to vector<256xf32>
    %97 = vector.shape_cast %96 : vector<256xf32> to vector<1x256xf32>
    %c0_28 = arith.constant 0 : index
    %c0_29 = arith.constant 0 : index
    %c0_30 = arith.constant 0 : index
    %98 = vector.load %arg8[%c0_28, %c0_29, %c0_30] : memref<1x1x256xf32, #tpu.memory_space<vmem>>, vector<1x1x256xf32>
    %99 = vector.shape_cast %98 : vector<1x1x256xf32> to vector<1x256xf32>
    %100 = vector.shape_cast %97 : vector<1x256xf32> to vector<1x1x256xf32>
    tpu.vector_store %arg8[%c0_28, %c0_29, %c0_30], %100 {strides = array<i32>} : memref<1x1x256xf32, #tpu.memory_space<vmem>>, vector<1x1x256xf32>,
    %cst_31 = arith.constant 0.000000e+00 : f32
    %101 = vector.broadcast %cst_31 : f32 to vector<8x324xf32>
    %102 = arith.maximumf %38, %101 : vector<8x324xf32>
    %c0_32 = arith.constant 0 : index
    %c0_33 = arith.constant 0 : index
    %c0_34 = arith.constant 0 : index
    %103 = vector.load %arg7[%c0_32, %c0_33, %c0_34] : memref<1x8x324xf32, #tpu.memory_space<vmem>>, vector<1x8x324xf32>
    %104 = vector.shape_cast %103 : vector<1x8x324xf32> to vector<8x324xf32>
    %105 = vector.shape_cast %102 : vector<8x324xf32> to vector<1x8x324xf32>
    tpu.vector_store %arg7[%c0_32, %c0_33, %c0_34], %105 {strides = array<i32>} : memref<1x8x324xf32, #tpu.memory_space<vmem>>, vector<1x8x324xf32>,
    return
  }
  func.func @transform_0(%arg0: i32) -> (i32, i32, i32) {
    %c0_i32 = arith.constant 0 : i32
    %c0_i32_0 = arith.constant 0 : i32
    %c0_i32_1 = arith.constant 0 : i32
    return %arg0, %c0_i32, %c0_i32_0 : i32, i32, i32
  }
  func.func @transform_1(%arg0: i32) -> (i32, i32) {
    %c0_i32 = arith.constant 0 : i32
    %c0_i32_0 = arith.constant 0 : i32
    %c0_i32_1 = arith.constant 0 : i32
    return %c0_i32, %c0_i32_0 : i32, i32
  }
  func.func @transform_2(%arg0: i32) -> (i32, i32) {
    %c0_i32 = arith.constant 0 : i32
    %c0_i32_0 = arith.constant 0 : i32
    %c0_i32_1 = arith.constant 0 : i32
    return %c0_i32, %c0_i32_0 : i32, i32
  }
  func.func @transform_3(%arg0: i32) -> (i32, i32) {
    %c0_i32 = arith.constant 0 : i32
    %c0_i32_0 = arith.constant 0 : i32
    %c0_i32_1 = arith.constant 0 : i32
    return %c0_i32, %c0_i32_0 : i32, i32
  }
  func.func @transform_4(%arg0: i32) -> (i32, i32) {
    %c0_i32 = arith.constant 0 : i32
    %c0_i32_0 = arith.constant 0 : i32
    %c0_i32_1 = arith.constant 0 : i32
    return %c0_i32, %c0_i32_0 : i32, i32
  }
  func.func @transform_5(%arg0: i32) -> (i32, i32) {
    %c0_i32 = arith.constant 0 : i32
    %c0_i32_0 = arith.constant 0 : i32
    %c0_i32_1 = arith.constant 0 : i32
    return %c0_i32, %c0_i32_0 : i32, i32
  }
  func.func @transform_6(%arg0: i32) -> (i32, i32, i32) {
    %c0_i32 = arith.constant 0 : i32
    %c0_i32_0 = arith.constant 0 : i32
    %c0_i32_1 = arith.constant 0 : i32
    return %arg0, %c0_i32, %c0_i32_0 : i32, i32, i32
  }
  func.func @transform_7(%arg0: i32) -> (i32, i32, i32) {
    %c0_i32 = arith.constant 0 : i32
    %c0_i32_0 = arith.constant 0 : i32
    %c0_i32_1 = arith.constant 0 : i32
    return %arg0, %c0_i32, %c0_i32_0 : i32, i32, i32
  }
}

</mosaic_0001>

<llo_original>
// kernel: tpu_custom_call.1
$region0: #{tpu_custom_call.1}
  #allocation0 [shape = 'u32[]', space=smem, size = 0x4, offset = 0x4, fixed_abs, tag = 'smem constant byte address 0x4 - core index']
  #allocation1 [shape = 'u32[144,128]{1,0:T(1,128)}', space=vmem, size = 0x12000, scoped, tag = 'internal scratch']
  %s0 = inlined_call_operand.hbm [shape: f32[2,1,324], index: 0, kind: input, shape index: {}]
  %s1 = inlined_call_operand.hbm [shape: f32[8,9], index: 1, kind: input, shape index: {}]
  %s2 = inlined_call_operand.hbm [shape: f32[8,72], index: 2, kind: input, shape index: {}]
  %s3 = inlined_call_operand.vmem [shape: f32[4,72], index: 3, kind: input, shape index: {}]
  %s4 = inlined_call_operand.vmem [shape: f32[1,286], index: 4, kind: input, shape index: {}]
  %s5 = inlined_call_operand.hbm [shape: f32[256,256], index: 5, kind: input, shape index: {}]
  %s6 = inlined_call_operand.hbm [shape: f32[2,8,324], index: 6, kind: output, shape index: {0}]
  %s7 = inlined_call_operand.hbm [shape: f32[2,1,256], index: 7, kind: output, shape index: {1}]
  %8 = xla_tuple %s6, %s7
  %s9 = sld [smem:[#allocation0]]
  $region81: #{tpu_custom_call.1} parent=0
    _
  %s11 = ssub.s32 1, %s9
  %s12 = scalar_select 0, %s11, %s9
  $region1: #{tpu_custom_call.1} parent=0
    #allocation2 [shape = 'u8[3072]{0}', space=vmem, size = 0xc00, scoped, tag = 'input window, operand 0']
    #allocation3 [shape = 's32[2]{0}', space=sflag, size = 0x8, scoped, tag = 'scoped memory for tpu_custom_call.1']
    #allocation4 [shape = 's32[2]{0}', space=sflag, size = 0x8, scoped, tag = 'scoped memory for tpu_custom_call.1']
    #allocation5 [shape = 'u8[4096]{0}', space=vmem, size = 0x1000, scoped, tag = 'input window, operand 1, single buffered']
    #allocation6 [shape = 's32[1]{0}', space=sflag, size = 0x4, scoped, tag = 'scoped memory for tpu_custom_call.1']
    #allocation7 [shape = 'u8[4096]{0}', space=vmem, size = 0x1000, scoped, tag = 'input window, operand 2, single buffered']
    #allocation8 [shape = 'u8[262144]{0}', space=vmem, size = 0x40000, scoped, tag = 'input window, operand 5, single buffered']
    #allocation9 [shape = 's32[1]{0}', space=sflag, size = 0x4, scoped, tag = 'scoped memory for tpu_custom_call.1']
    #allocation10 [shape = 'u8[24576]{0}', space=vmem, size = 0x6000, scoped, tag = 'output window, operand 0']
    #allocation11 [shape = 'u8[2048]{0}', space=vmem, size = 0x800, scoped, tag = 'output window, operand 1']
    #allocation12 [shape = 's32[2]{0}', space=sflag, size = 0x8, scoped, tag = 'scoped memory for tpu_custom_call.1']
    %13 = vsyncpa [#allocation3], 0
    %s14 = scalar_lea.sflag [#allocation3], 1
    %15 = vsyncpa %s14, 0
    %16 = vsyncpa [#allocation6], 0
    %17 = vsyncpa [#allocation9], 0
    %18 = vsyncpa [#allocation4], 0
    %s19 = scalar_lea.sflag [#allocation4], 1
    %20 = vsyncpa %s19, 0
    %21 = vsyncpa [#allocation12], 0
    %s22 = scalar_lea.sflag [#allocation12], 1
    %23 = vsyncpa %s22, 0
    loop: start=0, step=1, limit=4
    $region2: #{tpu_custom_call.1} parent=1 // loop_pre_header
      _
    $region3: #{tpu_custom_call.1} parent=1 // loop_header
      %s25 = sphi 0, %s29
      %p26 = scmp.ge.s32.totalorder %s25, 4
      %s35 = sphi 0, %s37
      %s38 = sphi 0, %s35
      %s39 = sphi 0, %s38
      %s55 = sphi 0, %s39
      %s59 = sphi 0, %s59
      %s61 = sphi 0, %s59
      %s62 = sphi 0, %s61
      %s76 = sphi 0, %s62
      %s80 = sphi 0, %s80
      %s82 = sphi 0, %s80
      %s83 = sphi 0, %s82
      %s97 = sphi 0, %s83
      %s101 = sphi 0, %s101
      %s103 = sphi 0, %s101
      %s104 = sphi 0, %s103
      %s118 = sphi 0, %s104
      %s122 = sphi 0, %s122
      %s124 = sphi 0, %s122
      %s125 = sphi 0, %s124
      %s139 = sphi 0, %s125
      %s143 = sphi 0, %s143
      %s145 = sphi 0, %s143
      %s146 = sphi 0, %s145
      %s160 = sphi 0, %s146
      %s166 = sphi 0, %s168
      %s169 = sphi 0, %s166
      %s170 = sphi 0, %s169
      %s186 = sphi 0, %s170
      %s192 = sphi 0, %s194
      %s195 = sphi 0, %s192
      %s196 = sphi 0, %s195
      %s212 = sphi 0, %s196
    $region4: #{tpu_custom_call.1} parent=1 // loop_header_branch
      %28 = sbr.rel (%p26) target = $region8
    $region5: #{tpu_custom_call.1} parent=1 // loop_body
      %s30 = ssub.s32 %s25, 1
      %s31 = ssub.s32 %s25, 2
      %s32 = sadd.s32 %s25, 1
      %s33 = ssub.s32 %s25, %s32
      %p34 = scmp.eq.s32.totalorder %s33, 0
      %s36 = sadd.s32 %s35, 1
      %s37 = scalar_select %p34, %s35, %s36
      %p40 = pneg %p34
      %p41 = scmp.eq.s32.totalorder %s25, 1
      %p42 = por %p40, %p41
      %p43 = scmp.ne.s32.totalorder %s35, %s38
      %p44 = scmp.eq.s32.totalorder %s25, 0
      %p45 = por %p43, %p44
      %p46 = scmp.ne.s32.totalorder %s35, %s38
      %p47 = scmp.eq.s32.totalorder %s30, 1
      %p48 = por %p46, %p47
      %p49 = scmp.ne.s32.totalorder %s38, %s39
      %p50 = scmp.eq.s32.totalorder %s30, 0
      %p51 = por %p49, %p50
      %p52 = scmp.ne.s32.totalorder %s38, %s39
      %p53 = scmp.eq.s32.totalorder %s31, 1
      %p54 = por %p52, %p53
      %p56 = scmp.ne.s32.totalorder %s39, %s55
      %p57 = scmp.eq.s32.totalorder %s31, 0
      %p58 = por %p56, %p57
      %s60 = sadd.s32 %s59, 1
      %p63 = scmp.eq.s32.totalorder %s25, 1
      %p64 = scmp.ne.s32.totalorder %s59, %s61
      %p65 = scmp.eq.s32.totalorder %s25, 0
      %p66 = por %p64, %p65
      %p67 = scmp.ne.s32.totalorder %s59, %s61
      %p68 = scmp.eq.s32.totalorder %s30, 1
      %p69 = por %p67, %p68
      %p70 = scmp.ne.s32.totalorder %s61, %s62
      %p71 = scmp.eq.s32.totalorder %s30, 0
      %p72 = por %p70, %p71
      %p73 = scmp.ne.s32.totalorder %s61, %s62
      %p74 = scmp.eq.s32.totalorder %s31, 1
      %p75 = por %p73, %p74
      %p77 = scmp.ne.s32.totalorder %s62, %s76
      %p78 = scmp.eq.s32.totalorder %s31, 0
      %p79 = por %p77, %p78
      %s81 = sadd.s32 %s80, 1
      %p84 = scmp.eq.s32.totalorder %s25, 1
      %p85 = scmp.ne.s32.totalorder %s80, %s82
      %p86 = scmp.eq.s32.totalorder %s25, 0
      %p87 = por %p85, %p86
      %p88 = scmp.ne.s32.totalorder %s80, %s82
      %p89 = scmp.eq.s32.totalorder %s30, 1
      %p90 = por %p88, %p89
      %p91 = scmp.ne.s32.totalorder %s82, %s83
      %p92 = scmp.eq.s32.totalorder %s30, 0
      %p93 = por %p91, %p92
      %p94 = scmp.ne.s32.totalorder %s82, %s83
      %p95 = scmp.eq.s32.totalorder %s31, 1
      %p96 = por %p94, %p95
      %p98 = scmp.ne.s32.totalorder %s83, %s97
      %p99 = scmp.eq.s32.totalorder %s31, 0
      %p100 = por %p98, %p99
      %s102 = sadd.s32 %s101, 1
      %p105 = scmp.eq.s32.totalorder %s25, 1
      %p106 = scmp.ne.s32.totalorder %s101, %s103
      %p107 = scmp.eq.s32.totalorder %s25, 0
      %p108 = por %p106, %p107
      %p109 = scmp.ne.s32.totalorder %s101, %s103
      %p110 = scmp.eq.s32.totalorder %s30, 1
      %p111 = por %p109, %p110
      %p112 = scmp.ne.s32.totalorder %s103, %s104
      %p113 = scmp.eq.s32.totalorder %s30, 0
      %p114 = por %p112, %p113
      %p115 = scmp.ne.s32.totalorder %s103, %s104
      %p116 = scmp.eq.s32.totalorder %s31, 1
      %p117 = por %p115, %p116
      %p119 = scmp.ne.s32.totalorder %s104, %s118
      %p120 = scmp.eq.s32.totalorder %s31, 0
      %p121 = por %p119, %p120
      %s123 = sadd.s32 %s122, 1
      %p126 = scmp.eq.s32.totalorder %s25, 1
      %p127 = scmp.ne.s32.totalorder %s122, %s124
      %p128 = scmp.eq.s32.totalorder %s25, 0
      %p129 = por %p127, %p128
      %p130 = scmp.ne.s32.totalorder %s122, %s124
      %p131 = scmp.eq.s32.totalorder %s30, 1
      %p132 = por %p130, %p131
      %p133 = scmp.ne.s32.totalorder %s124, %s125
      %p134 = scmp.eq.s32.totalorder %s30, 0
      %p135 = por %p133, %p134
      %p136 = scmp.ne.s32.totalorder %s124, %s125
      %p137 = scmp.eq.s32.totalorder %s31, 1
      %p138 = por %p136, %p137
      %p140 = scmp.ne.s32.totalorder %s125, %s139
      %p141 = scmp.eq.s32.totalorder %s31, 0
      %p142 = por %p140, %p141
      %s144 = sadd.s32 %s143, 1
      %p147 = scmp.eq.s32.totalorder %s25, 1
      %p148 = scmp.ne.s32.totalorder %s143, %s145
      %p149 = scmp.eq.s32.totalorder %s25, 0
      %p150 = por %p148, %p149
      %p151 = scmp.ne.s32.totalorder %s143, %s145
      %p152 = scmp.eq.s32.totalorder %s30, 1
      %p153 = por %p151, %p152
      %p154 = scmp.ne.s32.totalorder %s145, %s146
      %p155 = scmp.eq.s32.totalorder %s30, 0
      %p156 = por %p154, %p155
      %p157 = scmp.ne.s32.totalorder %s145, %s146
      %p158 = scmp.eq.s32.totalorder %s31, 1
      %p159 = por %p157, %p158
      %p161 = scmp.ne.s32.totalorder %s146, %s160
      %p162 = scmp.eq.s32.totalorder %s31, 0
      %p163 = por %p161, %p162
      %s164 = ssub.s32 %s25, %s32
      %p165 = scmp.eq.s32.totalorder %s164, 0
      %s167 = sadd.s32 %s166, 1
      %s168 = scalar_select %p165, %s166, %s167
      %p171 = pneg %p165
      %p172 = scmp.eq.s32.totalorder %s25, 1
      %p173 = por %p171, %p172
      %p174 = scmp.ne.s32.totalorder %s166, %s169
      %p175 = scmp.eq.s32.totalorder %s25, 0
      %p176 = por %p174, %p175
      %p177 = scmp.ne.s32.totalorder %s166, %s169
      %p178 = scmp.eq.s32.totalorder %s30, 1
      %p179 = por %p177, %p178
      %p180 = scmp.ne.s32.totalorder %s169, %s170
      %p181 = scmp.eq.s32.totalorder %s30, 0
      %p182 = por %p180, %p181
      %p183 = scmp.ne.s32.totalorder %s169, %s170
      %p184 = scmp.eq.s32.totalorder %s31, 1
      %p185 = por %p183, %p184
      %p187 = scmp.ne.s32.totalorder %s170, %s186
      %p188 = scmp.eq.s32.totalorder %s31, 0
      %p189 = por %p187, %p188
      %s190 = ssub.s32 %s25, %s32
      %p191 = scmp.eq.s32.totalorder %s190, 0
      %s193 = sadd.s32 %s192, 1
      %s194 = scalar_select %p191, %s192, %s193
      %p197 = pneg %p191
      %p198 = scmp.eq.s32.totalorder %s25, 1
      %p199 = por %p197, %p198
      %p200 = scmp.ne.s32.totalorder %s192, %s195
      %p201 = scmp.eq.s32.totalorder %s25, 0
      %p202 = por %p200, %p201
      %p203 = scmp.ne.s32.totalorder %s192, %s195
      %p204 = scmp.eq.s32.totalorder %s30, 1
      %p205 = por %p203, %p204
      %p206 = scmp.ne.s32.totalorder %s195, %s196
      %p207 = scmp.eq.s32.totalorder %s30, 0
      %p208 = por %p206, %p207
      %p209 = scmp.ne.s32.totalorder %s195, %s196
      %p210 = scmp.eq.s32.totalorder %s31, 1
      %p211 = por %p209, %p210
      %p213 = scmp.ne.s32.totalorder %s196, %s212
      %p214 = scmp.eq.s32.totalorder %s31, 0
      %p215 = por %p213, %p214
      %p216 = scmp.le.s32.totalorder 1, %s25
      %p217 = scmp.lt.s32.totalorder %s25, 3
      %p218 = pnand %p216, %p217
      %p219 = pneg %p218
      // Predicated region
      $region9: #{tpu_custom_call.1} parent=5 // pred_check
        _
      $region10: #{tpu_custom_call.1} parent=5 // pred_check_branch
        %221 = sbr.rel (%p218) target = $region12
      $region11: #{tpu_custom_call.1} parent=5 // pred_region
        %s222 = ssub.s32 %s25, 1
        // Predicated region
        $region13: #{tpu_custom_call.1} parent=11 // pred_check
          %p223 = pneg %p72
        $region14: #{tpu_custom_call.1} parent=11 // pred_check_branch
          %225 = sbr.rel (%p223) target = $region16
        $region15: #{tpu_custom_call.1} parent=11 // pred_region
          %s227 = ssub.s32 128, 128
          %228 = vsyncadd [#allocation6], %s227
          %s230 = sshll.u32 [#allocation5], 4
          %s231 = int_to_ptr.vmem [resolvable:$true] %s230
          %233 = dma.hbm_to_vmem [thread:$0]  %s1, 128, %s231, [#allocation6]
        $region16: #{tpu_custom_call.1} parent=11 // pred_fallthru
          _
        // Predicated region
        $region17: #{tpu_custom_call.1} parent=11 // pred_check
          %p234 = pneg %p93
        $region18: #{tpu_custom_call.1} parent=11 // pred_check_branch
          %236 = sbr.rel (%p234) target = $region20
        $region19: #{tpu_custom_call.1} parent=11 // pred_region
          %s238 = ssub.s32 128, 128
          %239 = vsyncadd [#allocation6], %s238
          %s241 = sshll.u32 [#allocation7], 4
          %s242 = int_to_ptr.vmem [resolvable:$true] %s241
          %244 = dma.hbm_to_vmem [thread:$0]  %s2, 128, %s242, [#allocation6]
        $region20: #{tpu_custom_call.1} parent=11 // pred_fallthru
          _
        // Predicated region
        $region21: #{tpu_custom_call.1} parent=11 // pred_check
          %p245 = pneg %p114
        $region22: #{tpu_custom_call.1} parent=11 // pred_check_branch
          %247 = sbr.rel (%p245) target = $region24
        $region23: #{tpu_custom_call.1} parent=11 // pred_region
          _
        $region24: #{tpu_custom_call.1} parent=11 // pred_fallthru
          _
        // Predicated region
        $region25: #{tpu_custom_call.1} parent=11 // pred_check
          %p248 = pneg %p135
        $region26: #{tpu_custom_call.1} parent=11 // pred_check_branch
          %250 = sbr.rel (%p248) target = $region28
        $region27: #{tpu_custom_call.1} parent=11 // pred_region
          _
        $region28: #{tpu_custom_call.1} parent=11 // pred_fallthru
          _
        // Predicated region
        $region29: #{tpu_custom_call.1} parent=11 // pred_check
          %p251 = pneg %p156
        $region30: #{tpu_custom_call.1} parent=11 // pred_check_branch
          %253 = sbr.rel (%p251) target = $region32
        $region31: #{tpu_custom_call.1} parent=11 // pred_region
          %s255 = ssub.s32 8192, 8192
          %256 = vsyncadd [#allocation9], %s255
          %s257 = sshll.u32 [#allocation8], 4
          %s258 = int_to_ptr.vmem [resolvable:$true] %s257
          %263 = dma.hbm_to_vmem [thread:$0]  %s5, 8192, %s258, [#allocation9], 256, 256, 16
        $region32: #{tpu_custom_call.1} parent=11 // pred_fallthru
          _
      $region12: #{tpu_custom_call.1} parent=5 // pred_fallthru
        _
      %p264 = scmp.lt.s32.totalorder %s25, 2
      // Predicated region
      $region33: #{tpu_custom_call.1} parent=5 // pred_check
        %p265 = pneg %p264
      $region34: #{tpu_custom_call.1} parent=5 // pred_check_branch
        %267 = sbr.rel (%p265) target = $region36
      $region35: #{tpu_custom_call.1} parent=5 // pred_region
        // Predicated region
        $region37: #{tpu_custom_call.1} parent=35 // pred_check
          %p268 = pneg %p45
        $region38: #{tpu_custom_call.1} parent=35 // pred_check_branch
          %270 = sbr.rel (%p268) target = $region40
        $region39: #{tpu_custom_call.1} parent=35 // pred_region
          %s271 = sand.u32 %s35, 1
          %s272 = scalar_lea.sflag [#allocation3], %s271
          %s273 = sand.u32 %s35, 1
          %s274 = smul.addr %s273, 3
          %s275 = scalar_lea.vmem [#allocation2], %s274
          %s277 = ssub.s32 48, 48
          %278 = vsyncadd %s272, %s277
          %s279 = smul.addr %s25, 3
          %s280 = smul.addr %s279, 16
          %s281 = scalar_lea.hbm %s0, %s280
          %s283 = sshll.u32 %s275, 4
          %s284 = int_to_ptr.vmem [resolvable:$true] %s283
          %286 = dma.hbm_to_vmem [thread:$0]  %s281, 48, %s284, %s272
        $region40: #{tpu_custom_call.1} parent=35 // pred_fallthru
          _
      $region36: #{tpu_custom_call.1} parent=5 // pred_fallthru
        _
      %p287 = scmp.le.s32.totalorder 1, %s25
      %p288 = scmp.lt.s32.totalorder %s25, 3
      %p289 = pnand %p287, %p288
      %p290 = pneg %p289
      // Predicated region
      $region41: #{tpu_custom_call.1} parent=5 // pred_check
        _
      $region42: #{tpu_custom_call.1} parent=5 // pred_check_branch
        %292 = sbr.rel (%p289) target = $region44
      $region43: #{tpu_custom_call.1} parent=5 // pred_region
        %s293 = ssub.s32 %s25, 1
        %s294 = sand.u32 %s38, 1
        %s295 = scalar_lea.sflag [#allocation3], %s294
        %s296 = sand.u32 %s38, 1
        %s297 = smul.addr %s296, 3
        %s298 = scalar_lea.vmem [#allocation2], %s297
        // Predicated region
        $region45: #{tpu_custom_call.1} parent=43 // pred_check
          %p299 = pneg %p51
        $region46: #{tpu_custom_call.1} parent=43 // pred_check_branch
          %301 = sbr.rel (%p299) target = $region48
        $region47: #{tpu_custom_call.1} parent=43 // pred_region
          %302 = dma.done %s295, 48
        $region48: #{tpu_custom_call.1} parent=43 // pred_fallthru
          _
        // Predicated region
        $region49: #{tpu_custom_call.1} parent=43 // pred_check
          %p303 = pneg %p72
        $region50: #{tpu_custom_call.1} parent=43 // pred_check_branch
          %305 = sbr.rel (%p303) target = $region52
        $region51: #{tpu_custom_call.1} parent=43 // pred_region
          %306 = dma.done [#allocation6], 128
        $region52: #{tpu_custom_call.1} parent=43 // pred_fallthru
          _
        // Predicated region
        $region53: #{tpu_custom_call.1} parent=43 // pred_check
          %p307 = pneg %p93
        $region54: #{tpu_custom_call.1} parent=43 // pred_check_branch
          %309 = sbr.rel (%p307) target = $region56
        $region55: #{tpu_custom_call.1} parent=43 // pred_region
          %310 = dma.done [#allocation6], 128
        $region56: #{tpu_custom_call.1} parent=43 // pred_fallthru
          _
        // Predicated region
        $region57: #{tpu_custom_call.1} parent=43 // pred_check
          %p311 = pneg %p156
        $region58: #{tpu_custom_call.1} parent=43 // pred_check_branch
          %313 = sbr.rel (%p311) target = $region60
        $region59: #{tpu_custom_call.1} parent=43 // pred_region
          %314 = dma.done [#allocation9], 8192
        $region60: #{tpu_custom_call.1} parent=43 // pred_fallthru
          _
        %s315 = sand.u32 %s38, 1
        %s316 = scalar_lea.sflag [#allocation3], %s315
        %s317 = sand.u32 %s38, 1
        %s318 = smul.addr %s317, 3
        %s319 = scalar_lea.vmem [#allocation2], %s318
        %p320 = pneg %p51
        %p321 = pneg %p48
        %p322 = pneg %p72
        %p323 = pneg %p69
        %p324 = pneg %p93
        %p325 = pneg %p90
        %p326 = pneg %p114
        %p327 = pneg %p111
        %p328 = pneg %p135
        %p329 = pneg %p132
        %p330 = pneg %p156
        %p331 = pneg %p153
        %p332 = pneg %p182
        %p333 = pneg %p179
        %s334 = sand.u32 %s169, 1
        %s335 = scalar_lea.sflag [#allocation4], %s334
        %s336 = sand.u32 %s169, 1
        %s337 = smul.addr %s336, 24
        %s338 = scalar_lea.vmem [#allocation10], %s337
        %p339 = pneg %p208
        %p340 = pneg %p205
        %s341 = sand.u32 %s195, 1
        %s342 = scalar_lea.sflag [#allocation12], %s341
        %s343 = sand.u32 %s195, 1
        %s344 = smul.addr %s343, 2
        %s345 = scalar_lea.vmem [#allocation11], %s344
        %v346 = vld [vmem:[%s298] sm:$0x7]
        %v347 = vld [vmem:[%s4] sm:$0x7]
        %v348 = vld [vmem:[#allocation5] sm:$0xff]
        %v350 = vlaneseq
        %v351 = vshrl.u32 %v350, 7
        %v352 = vsub.s32 0, %v351
        %v353 = vrot.slane %v346, %v352
        %v354 = vlaneseq
        %v355 = vshrl.u32 %v354, 7
        %v356 = vsub.s32 1, %v355
        %v357 = vrot.slane %v346, %v356
        %v358 = vlaneseq
        %v359 = vshrl.u32 %v358, 7
        %v360 = vsub.s32 2, %v359
        %v361 = vrot.slane %v346, %v360
        %365 = vrot.lane.b32.xlu0 %v353, 127
        %v366 = vpop.permute.xlu0 %365
        %367 = vrot.lane.b32.xlu0 %v357, 127
        %v368 = vpop.permute.xlu0 %367
        %369 = vrot.lane.b32.xlu0 %v361, 127
        %v370 = vpop.permute.xlu0 %369
        %vm371 = vcmask 1039360
        %v372 = vsel %vm371, %v366, %v368
        %v373 = vsel %vm371, %v368, %v370
        %377 = vrot.lane.b32.xlu0 %v353, 126
        %v378 = vpop.permute.xlu0 %377
        %379 = vrot.lane.b32.xlu0 %v357, 126
        %v380 = vpop.permute.xlu0 %379
        %381 = vrot.lane.b32.xlu0 %v361, 126
        %v382 = vpop.permute.xlu0 %381
        %vm383 = vcmask 1031168
        %v384 = vsel %vm383, %v378, %v380
        %v385 = vsel %vm383, %v380, %v382
        %389 = vrot.lane.b32.xlu0 %v353, 110
        %v390 = vpop.permute.xlu0 %389
        %391 = vrot.lane.b32.xlu0 %v357, 110
        %v392 = vpop.permute.xlu0 %391
        %393 = vrot.lane.b32.xlu0 %v361, 110
        %v394 = vpop.permute.xlu0 %393
        %vm395 = vcmask 900096
        %v396 = vsel %vm395, %v390, %v392
        %v397 = vsel %vm395, %v392, %v394
        %401 = vrot.lane.b32.xlu0 %v353, 109
        %v402 = vpop.permute.xlu0 %401
        %403 = vrot.lane.b32.xlu0 %v357, 109
        %v404 = vpop.permute.xlu0 %403
        %405 = vrot.lane.b32.xlu0 %v361, 109
        %v406 = vpop.permute.xlu0 %405
        %vm407 = vcmask 891904
        %v408 = vsel %vm407, %v402, %v404
        %v409 = vsel %vm407, %v404, %v406
        %413 = vrot.lane.b32.xlu0 %v353, 108
        %v414 = vpop.permute.xlu0 %413
        %415 = vrot.lane.b32.xlu0 %v357, 108
        %v416 = vpop.permute.xlu0 %415
        %417 = vrot.lane.b32.xlu0 %v361, 108
        %v418 = vpop.permute.xlu0 %417
        %vm419 = vcmask 883712
        %v420 = vsel %vm419, %v414, %v416
        %v421 = vsel %vm419, %v416, %v418
        %425 = vrot.lane.b32.xlu0 %v353, 92
        %v426 = vpop.permute.xlu0 %425
        %427 = vrot.lane.b32.xlu0 %v357, 92
        %v428 = vpop.permute.xlu0 %427
        %429 = vrot.lane.b32.xlu0 %v361, 92
        %v430 = vpop.permute.xlu0 %429
        %vm431 = vcmask 752640
        %v432 = vsel %vm431, %v426, %v428
        %v433 = vsel %vm431, %v428, %v430
        %437 = vrot.lane.b32.xlu0 %v353, 91
        %v438 = vpop.permute.xlu0 %437
        %439 = vrot.lane.b32.xlu0 %v357, 91
        %v440 = vpop.permute.xlu0 %439
        %441 = vrot.lane.b32.xlu0 %v361, 91
        %v442 = vpop.permute.xlu0 %441
        %vm443 = vcmask 744448
        %v444 = vsel %vm443, %v438, %v440
        %v445 = vsel %vm443, %v440, %v442
        %449 = vrot.lane.b32.xlu0 %v353, 90
        %v450 = vpop.permute.xlu0 %449
        %451 = vrot.lane.b32.xlu0 %v357, 90
        %v452 = vpop.permute.xlu0 %451
        %453 = vrot.lane.b32.xlu0 %v361, 90
        %v454 = vpop.permute.xlu0 %453
        %vm455 = vcmask 736256
        %v456 = vsel %vm455, %v450, %v452
        %v457 = vsel %vm455, %v452, %v454
        %vm458 = vcmask 1040384
        %v459 = vsel %vm458, %v353, %v372
        %v460 = vsel %vm458, %v357, %v373
        %v461 = vsel %vm458, %v361, %v370
        %vm462 = vcmask 1041408
        %v463 = vsel %vm462, %v459, %v384
        %v464 = vsel %vm462, %v460, %v385
        %v465 = vsel %vm462, %v461, %v382
        %vm466 = vcmask 1042432
        %v467 = vsel %vm466, %v463, %v396
        %v468 = vsel %vm466, %v464, %v397
        %v469 = vsel %vm466, %v465, %v394
        %vm470 = vcmask 1043456
        %v471 = vsel %vm470, %v467, %v408
        %v472 = vsel %vm470, %v468, %v409
        %v473 = vsel %vm470, %v469, %v406
        %vm474 = vcmask 1044480
        %v475 = vsel %vm474, %v471, %v420
        %v476 = vsel %vm474, %v472, %v421
        %v477 = vsel %vm474, %v473, %v418
        %vm478 = vcmask 1045504
        %v479 = vsel %vm478, %v475, %v432
        %v480 = vsel %vm478, %v476, %v433
        %v481 = vsel %vm478, %v477, %v430
        %vm482 = vcmask 1046528
        %v483 = vsel %vm482, %v479, %v444
        %v484 = vsel %vm482, %v480, %v445
        %v485 = vsel %vm482, %v481, %v442
        %vm486 = vcmask 72704
        %v488 = vsel %vm486, %v348, 0
        %v490 = vsel %vm458, %v456, 0
        %v492 = vsel %vm458, %v457, 0
        %v494 = vsel %vm458, %v454, 0
        %496 = vmatprep.subr.mxu0 %v484
        %497 = vmatpush1.msra.mxu0 %v483
        %498 = vmatprep.subr.mxu0 %v492
        %499 = vmatpush1.msra.mxu0 %v490
        %500 = vmatprep.subr.mxu0 0.0
        %501 = vmatpush1.msra.mxu0 0.0
        %502 = vmatprep.subr.mxu0 0.0
        %503 = vmatpush1.msra.mxu0 0.0
        %504 = vmatprep.subr.mxu0 0.0
        %505 = vmatpush1.msra.mxu0 0.0
        %506 = vmatprep.subr.mxu0 0.0
        %507 = vmatpush1.msra.mxu0 0.0
        %508 = vmatprep.subr.mxu0 0.0
        %509 = vmatpush1.msra.mxu0 0.0
        %510 = vmatprep.subr.mxu0 0.0
        %511 = vmatpush1.msra.mxu0 0.0
        %512 = vmatprep.subr.mxu0 0.0
        %513 = vmatpush1.msra.mxu0 0.0
        %514 = vmatprep.subr.mxu0 0.0
        %515 = vmatpush1.msra.mxu0 0.0
        %516 = vmatprep.subr.mxu0 0.0
        %517 = vmatpush1.msra.mxu0 0.0
        %518 = vmatprep.subr.mxu0 0.0
        %519 = vmatpush1.msra.mxu0 0.0
        %520 = vmatprep.subr.mxu0 0.0
        %521 = vmatpush1.msra.mxu0 0.0
        %522 = vmatprep.subr.mxu0 0.0
        %523 = vmatpush1.msra.mxu0 0.0
        %524 = vmatprep.subr.mxu0 0.0
        %525 = vmatpush1.msra.mxu0 0.0
        %526 = vmatprep.subr.mxu0 0.0
        %527 = vmatpush1.msra.mxu0 0.0
        %528 = vmatprep.subr.mxu0 0.0
        %529 = vmatpush1.msra.mxu0 0.0
        %530 = vmatprep.subr.mxu0 0.0
        %531 = vmatpush1.msra.mxu0 0.0
        %532 = vmatprep.subr.mxu0 0.0
        %533 = vmatpush1.msra.mxu0 0.0
        %534 = vmatprep.subr.mxu0 0.0
        %535 = vmatpush1.msra.mxu0 0.0
        %536 = vmatprep.subr.mxu0 0.0
        %537 = vmatpush1.msra.mxu0 0.0
        %538 = vmatprep.subr.mxu0 0.0
        %539 = vmatpush1.msra.mxu0 0.0
        %540 = vmatprep.subr.mxu0 0.0
        %541 = vmatpush1.msra.mxu0 0.0
        %542 = vmatprep.subr.mxu0 0.0
        %543 = vmatpush1.msra.mxu0 0.0
        %544 = vmatprep.subr.mxu0 0.0
        %545 = vmatpush1.msra.mxu0 0.0
        %546 = vmatprep.subr.mxu0 0.0
        %547 = vmatpush1.msra.mxu0 0.0
        %548 = vmatprep.subr.mxu0 0.0
        %549 = vmatpush1.msra.mxu0 0.0
        %550 = vmatprep.subr.mxu0 0.0
        %551 = vmatpush1.msra.mxu0 0.0
        %552 = vmatprep.subr.mxu0 0.0
        %553 = vmatpush1.msra.mxu0 0.0
        %554 = vmatprep.subr.mxu0 0.0
        %555 = vmatpush1.msra.mxu0 0.0
        %556 = vmatprep.subr.mxu0 0.0
        %557 = vmatpush1.msra.mxu0 0.0
        %558 = vmatprep.subr.mxu0 0.0
        %559 = vmatpush1.msra.mxu0 0.0
        %560 = vmatprep.mubr.f32.mxu0 0.0
        %561 = vmatmul.mubr.f32.gmra.mrb[0].mxu0 %v488
        %v562 = vpop.f32.mrb[0].mxu0
        %v563 = vadd.f32 0.0, %v562
        %v564 = vpop.f32.mrb[0].mxu0
        %v565 = vadd.f32 0.0, %v564
        %566 = vdwg.mxu0
        %567 = vmatprep.subr.mxu0 0.0
        %568 = vmatpush1.msra.mxu0 %v485
        %569 = vmatprep.subr.mxu0 0.0
        %570 = vmatpush1.msra.mxu0 %v494
        %571 = vmatprep.subr.mxu0 0.0
        %572 = vmatpush1.msra.mxu0 0.0
        %573 = vmatprep.subr.mxu0 0.0
        %574 = vmatpush1.msra.mxu0 0.0
        %575 = vmatprep.subr.mxu0 0.0
        %576 = vmatpush1.msra.mxu0 0.0
        %577 = vmatprep.subr.mxu0 0.0
        %578 = vmatpush1.msra.mxu0 0.0
        %579 = vmatprep.subr.mxu0 0.0
        %580 = vmatpush1.msra.mxu0 0.0
        %581 = vmatprep.subr.mxu0 0.0
        %582 = vmatpush1.msra.mxu0 0.0
        %583 = vmatprep.subr.mxu0 0.0
        %584 = vmatpush1.msra.mxu0 0.0
        %585 = vmatprep.subr.mxu0 0.0
        %586 = vmatpush1.msra.mxu0 0.0
        %587 = vmatprep.subr.mxu0 0.0
        %588 = vmatpush1.msra.mxu0 0.0
        %589 = vmatprep.subr.mxu0 0.0
        %590 = vmatpush1.msra.mxu0 0.0
        %591 = vmatprep.subr.mxu0 0.0
        %592 = vmatpush1.msra.mxu0 0.0
        %593 = vmatprep.subr.mxu0 0.0
        %594 = vmatpush1.msra.mxu0 0.0
        %595 = vmatprep.subr.mxu0 0.0
        %596 = vmatpush1.msra.mxu0 0.0
        %597 = vmatprep.subr.mxu0 0.0
        %598 = vmatpush1.msra.mxu0 0.0
        %599 = vmatprep.subr.mxu0 0.0
        %600 = vmatpush1.msra.mxu0 0.0
        %601 = vmatprep.subr.mxu0 0.0
        %602 = vmatpush1.msra.mxu0 0.0
        %603 = vmatprep.subr.mxu0 0.0
        %604 = vmatpush1.msra.mxu0 0.0
        %605 = vmatprep.subr.mxu0 0.0
        %606 = vmatpush1.msra.mxu0 0.0
        %607 = vmatprep.subr.mxu0 0.0
        %608 = vmatpush1.msra.mxu0 0.0
        %609 = vmatprep.subr.mxu0 0.0
        %610 = vmatpush1.msra.mxu0 0.0
        %611 = vmatprep.subr.mxu0 0.0
        %612 = vmatpush1.msra.mxu0 0.0
        %613 = vmatprep.subr.mxu0 0.0
        %614 = vmatpush1.msra.mxu0 0.0
        %615 = vmatprep.subr.mxu0 0.0
        %616 = vmatpush1.msra.mxu0 0.0
        %617 = vmatprep.subr.mxu0 0.0
        %618 = vmatpush1.msra.mxu0 0.0
        %619 = vmatprep.subr.mxu0 0.0
        %620 = vmatpush1.msra.mxu0 0.0
        %621 = vmatprep.subr.mxu0 0.0
        %622 = vmatpush1.msra.mxu0 0.0
        %623 = vmatprep.subr.mxu0 0.0
        %624 = vmatpush1.msra.mxu0 0.0
        %625 = vmatprep.subr.mxu0 0.0
        %626 = vmatpush1.msra.mxu0 0.0
        %627 = vmatprep.subr.mxu0 0.0
        %628 = vmatpush1.msra.mxu0 0.0
        %629 = vmatprep.subr.mxu0 0.0
        %630 = vmatpush1.msra.mxu0 0.0
        %631 = vmatprep.mubr.f32.mxu0 0.0
        %632 = vmatmul.mubr.f32.gmra.mrb[0].mxu0 %v488
        %v633 = vpop.f32.mrb[0].mxu0
        %v634 = vadd.f32 0.0, %v633
        %v635 = vpop.f32.mrb[0].mxu0
        %636 = vdwg.mxu0
        %v638 = vlaneseq
        %v639 = vshrl.u32 %v638, 7
        %v640 = vsub.s32 0, %v639
        %v641 = vrot.slane %v347, %v640
        %v642 = vlaneseq
        %v643 = vshrl.u32 %v642, 7
        %v644 = vsub.s32 1, %v643
        %v645 = vrot.slane %v347, %v644
        %v646 = vlaneseq
        %v647 = vshrl.u32 %v646, 7
        %v648 = vsub.s32 2, %v647
        %v649 = vrot.slane %v347, %v648
        %v653 = vmul.f32 %v563, %v641
        %v654 = vmul.f32 %v565, %v645
        %v655 = vmul.f32 %v634, %v649
        %659 = vrot.lane.b32.xlu0 %v653, 19
        %v660 = vpop.permute.xlu0 %659
        %661 = vrot.lane.b32.xlu0 %v654, 19
        %v662 = vpop.permute.xlu0 %661
        %663 = vrot.lane.b32.xlu0 %v655, 19
        %v664 = vpop.permute.xlu0 %663
        %vm665 = vcmask 154624
        %v666 = vsel %vm665, %v660, %v662
        %v667 = vsel %vm665, %v662, %v664
        %v671 = vsel %vm665, 0.0, %v660
        %vm672 = vcmask 400384
        %v673 = vsel %vm672, %v667, 0.0
        %v674 = vmax.f32 %v671, 0.0
        %v675 = vmax.f32 %v666, 0.0
        %v676 = vmax.f32 %v673, 0.0
        %v677 = vld [vmem:[#allocation7] sm:$0xff]
        %681 = vrot.lane.b32.xlu0 %v674, 127
        %v682 = vpop.permute.xlu0 %681
        %683 = vrot.lane.b32.xlu0 %v675, 127
        %v684 = vpop.permute.xlu0 %683
        %685 = vrot.lane.b32.xlu0 %v676, 127
        %v686 = vpop.permute.xlu0 %685
        %v687 = vsel %vm371, %v682, %v684
        %v688 = vsel %vm371, %v684, %v686
        %692 = vrot.lane.b32.xlu0 %v674, 126
        %v693 = vpop.permute.xlu0 %692
        %694 = vrot.lane.b32.xlu0 %v675, 126
        %v695 = vpop.permute.xlu0 %694
        %696 = vrot.lane.b32.xlu0 %v676, 126
        %v697 = vpop.permute.xlu0 %696
        %v698 = vsel %vm383, %v693, %v695
        %v699 = vsel %vm383, %v695, %v697
        %703 = vrot.lane.b32.xlu0 %v674, 110
        %v704 = vpop.permute.xlu0 %703
        %705 = vrot.lane.b32.xlu0 %v675, 110
        %v706 = vpop.permute.xlu0 %705
        %707 = vrot.lane.b32.xlu0 %v676, 110
        %v708 = vpop.permute.xlu0 %707
        %v709 = vsel %vm395, %v704, %v706
        %v710 = vsel %vm395, %v706, %v708
        %714 = vrot.lane.b32.xlu0 %v674, 109
        %v715 = vpop.permute.xlu0 %714
        %716 = vrot.lane.b32.xlu0 %v675, 109
        %v717 = vpop.permute.xlu0 %716
        %718 = vrot.lane.b32.xlu0 %v676, 109
        %v719 = vpop.permute.xlu0 %718
        %v720 = vsel %vm407, %v715, %v717
        %v721 = vsel %vm407, %v717, %v719
        %725 = vrot.lane.b32.xlu0 %v674, 108
        %v726 = vpop.permute.xlu0 %725
        %727 = vrot.lane.b32.xlu0 %v675, 108
        %v728 = vpop.permute.xlu0 %727
        %729 = vrot.lane.b32.xlu0 %v676, 108
        %v730 = vpop.permute.xlu0 %729
        %v731 = vsel %vm419, %v726, %v728
        %v732 = vsel %vm419, %v728, %v730
        %736 = vrot.lane.b32.xlu0 %v674, 92
        %v737 = vpop.permute.xlu0 %736
        %738 = vrot.lane.b32.xlu0 %v675, 92
        %v739 = vpop.permute.xlu0 %738
        %740 = vrot.lane.b32.xlu0 %v676, 92
        %v741 = vpop.permute.xlu0 %740
        %v742 = vsel %vm431, %v737, %v739
        %v743 = vsel %vm431, %v739, %v741
        %747 = vrot.lane.b32.xlu0 %v674, 91
        %v748 = vpop.permute.xlu0 %747
        %749 = vrot.lane.b32.xlu0 %v675, 91
        %v750 = vpop.permute.xlu0 %749
        %751 = vrot.lane.b32.xlu0 %v676, 91
        %v752 = vpop.permute.xlu0 %751
        %v753 = vsel %vm443, %v748, %v750
        %v754 = vsel %vm443, %v750, %v752
        %758 = vrot.lane.b32.xlu0 %v674, 90
        %v759 = vpop.permute.xlu0 %758
        %760 = vrot.lane.b32.xlu0 %v675, 90
        %v761 = vpop.permute.xlu0 %760
        %762 = vrot.lane.b32.xlu0 %v676, 90
        %v763 = vpop.permute.xlu0 %762
        %v764 = vsel %vm455, %v759, %v761
        %v765 = vsel %vm455, %v761, %v763
        %vm769 = vcmask 588800
        %v771 = vsel %vm769, %v677, 0
        %773 = vmatprep.subr.mxu0 %v675
        %774 = vmatpush1.msra.mxu0 %v674
        %775 = vmatprep.subr.mxu0 %v688
        %776 = vmatpush1.msra.mxu0 %v687
        %777 = vmatprep.subr.mxu0 %v699
        %778 = vmatpush1.msra.mxu0 %v698
        %779 = vmatprep.subr.mxu0 %v710
        %780 = vmatpush1.msra.mxu0 %v709
        %781 = vmatprep.subr.mxu0 %v721
        %782 = vmatpush1.msra.mxu0 %v720
        %783 = vmatprep.subr.mxu0 %v732
        %784 = vmatpush1.msra.mxu0 %v731
        %785 = vmatprep.subr.mxu0 %v743
        %786 = vmatpush1.msra.mxu0 %v742
        %787 = vmatprep.subr.mxu0 %v754
        %788 = vmatpush1.msra.mxu0 %v753
        %789 = vmatprep.subr.mxu0 %v765
        %790 = vmatpush1.msra.mxu0 %v764
        %791 = vmatprep.subr.mxu0 0.0
        %792 = vmatpush1.msra.mxu0 0.0
        %793 = vmatprep.subr.mxu0 0.0
        %794 = vmatpush1.msra.mxu0 0.0
        %795 = vmatprep.subr.mxu0 0.0
        %796 = vmatpush1.msra.mxu0 0.0
        %797 = vmatprep.subr.mxu0 0.0
        %798 = vmatpush1.msra.mxu0 0.0
        %799 = vmatprep.subr.mxu0 0.0
        %800 = vmatpush1.msra.mxu0 0.0
        %801 = vmatprep.subr.mxu0 0.0
        %802 = vmatpush1.msra.mxu0 0.0
        %803 = vmatprep.subr.mxu0 0.0
        %804 = vmatpush1.msra.mxu0 0.0
        %805 = vmatprep.subr.mxu0 0.0
        %806 = vmatpush1.msra.mxu0 0.0
        %807 = vmatprep.subr.mxu0 0.0
        %808 = vmatpush1.msra.mxu0 0.0
        %809 = vmatprep.subr.mxu0 0.0
        %810 = vmatpush1.msra.mxu0 0.0
        %811 = vmatprep.subr.mxu0 0.0
        %812 = vmatpush1.msra.mxu0 0.0
        %813 = vmatprep.subr.mxu0 0.0
        %814 = vmatpush1.msra.mxu0 0.0
        %815 = vmatprep.subr.mxu0 0.0
        %816 = vmatpush1.msra.mxu0 0.0
        %817 = vmatprep.subr.mxu0 0.0
        %818 = vmatpush1.msra.mxu0 0.0
        %819 = vmatprep.subr.mxu0 0.0
        %820 = vmatpush1.msra.mxu0 0.0
        %821 = vmatprep.subr.mxu0 0.0
        %822 = vmatpush1.msra.mxu0 0.0
        %823 = vmatprep.subr.mxu0 0.0
        %824 = vmatpush1.msra.mxu0 0.0
        %825 = vmatprep.subr.mxu0 0.0
        %826 = vmatpush1.msra.mxu0 0.0
        %827 = vmatprep.subr.mxu0 0.0
        %828 = vmatpush1.msra.mxu0 0.0
        %829 = vmatprep.subr.mxu0 0.0
        %830 = vmatpush1.msra.mxu0 0.0
        %831 = vmatprep.subr.mxu0 0.0
        %832 = vmatpush1.msra.mxu0 0.0
        %833 = vmatprep.subr.mxu0 0.0
        %834 = vmatpush1.msra.mxu0 0.0
        %835 = vmatprep.subr.mxu0 0.0
        %836 = vmatpush1.msra.mxu0 0.0
        %837 = vmatprep.mubr.f32.mxu0 0.0
        %838 = vmatmul.mubr.f32.gmra.mrb[0].mxu0 %v771
        %v839 = vpop.f32.mrb[0].mxu0
        %v840 = vadd.f32 0.0, %v839
        %v841 = vpop.f32.mrb[0].mxu0
        %v842 = vadd.f32 0.0, %v841
        %843 = vdwg.mxu0
        %844 = vmatprep.subr.mxu0 0.0
        %845 = vmatpush1.msra.mxu0 %v676
        %846 = vmatprep.subr.mxu0 0.0
        %847 = vmatpush1.msra.mxu0 %v686
        %848 = vmatprep.subr.mxu0 0.0
        %849 = vmatpush1.msra.mxu0 %v697
        %850 = vmatprep.subr.mxu0 0.0
        %851 = vmatpush1.msra.mxu0 %v708
        %852 = vmatprep.subr.mxu0 0.0
        %853 = vmatpush1.msra.mxu0 %v719
        %854 = vmatprep.subr.mxu0 0.0
        %855 = vmatpush1.msra.mxu0 %v730
        %856 = vmatprep.subr.mxu0 0.0
        %857 = vmatpush1.msra.mxu0 %v741
        %858 = vmatprep.subr.mxu0 0.0
        %859 = vmatpush1.msra.mxu0 %v752
        %860 = vmatprep.subr.mxu0 0.0
        %861 = vmatpush1.msra.mxu0 %v763
        %862 = vmatprep.subr.mxu0 0.0
        %863 = vmatpush1.msra.mxu0 0.0
        %864 = vmatprep.subr.mxu0 0.0
        %865 = vmatpush1.msra.mxu0 0.0
        %866 = vmatprep.subr.mxu0 0.0
        %867 = vmatpush1.msra.mxu0 0.0
        %868 = vmatprep.subr.mxu0 0.0
        %869 = vmatpush1.msra.mxu0 0.0
        %870 = vmatprep.subr.mxu0 0.0
        %871 = vmatpush1.msra.mxu0 0.0
        %872 = vmatprep.subr.mxu0 0.0
        %873 = vmatpush1.msra.mxu0 0.0
        %874 = vmatprep.subr.mxu0 0.0
        %875 = vmatpush1.msra.mxu0 0.0
        %876 = vmatprep.subr.mxu0 0.0
        %877 = vmatpush1.msra.mxu0 0.0
        %878 = vmatprep.subr.mxu0 0.0
        %879 = vmatpush1.msra.mxu0 0.0
        %880 = vmatprep.subr.mxu0 0.0
        %881 = vmatpush1.msra.mxu0 0.0
        %882 = vmatprep.subr.mxu0 0.0
        %883 = vmatpush1.msra.mxu0 0.0
        %884 = vmatprep.subr.mxu0 0.0
        %885 = vmatpush1.msra.mxu0 0.0
        %886 = vmatprep.subr.mxu0 0.0
        %887 = vmatpush1.msra.mxu0 0.0
        %888 = vmatprep.subr.mxu0 0.0
        %889 = vmatpush1.msra.mxu0 0.0
        %890 = vmatprep.subr.mxu0 0.0
        %891 = vmatpush1.msra.mxu0 0.0
        %892 = vmatprep.subr.mxu0 0.0
        %893 = vmatpush1.msra.mxu0 0.0
        %894 = vmatprep.subr.mxu0 0.0
        %895 = vmatpush1.msra.mxu0 0.0
        %896 = vmatprep.subr.mxu0 0.0
        %897 = vmatpush1.msra.mxu0 0.0
        %898 = vmatprep.subr.mxu0 0.0
        %899 = vmatpush1.msra.mxu0 0.0
        %900 = vmatprep.subr.mxu0 0.0
        %901 = vmatpush1.msra.mxu0 0.0
        %902 = vmatprep.subr.mxu0 0.0
        %903 = vmatpush1.msra.mxu0 0.0
        %904 = vmatprep.subr.mxu0 0.0
        %905 = vmatpush1.msra.mxu0 0.0
        %906 = vmatprep.subr.mxu0 0.0
        %907 = vmatpush1.msra.mxu0 0.0
        %908 = vmatprep.mubr.f32.mxu0 0.0
        %909 = vmatmul.mubr.f32.gmra.mrb[0].mxu0 %v771
        %v910 = vpop.f32.mrb[0].mxu0
        %v911 = vadd.f32 0.0, %v910
        %v912 = vpop.f32.mrb[0].mxu0
        %913 = vdwg.mxu0
        %v914 = vmul.f32 %v840, %v641
        %v915 = vmul.f32 %v842, %v645
        %v916 = vmul.f32 %v911, %v649
        %920 = vrot.lane.b32.xlu0 %v914, 19
        %v921 = vpop.permute.xlu0 %920
        %922 = vrot.lane.b32.xlu0 %v915, 19
        %v923 = vpop.permute.xlu0 %922
        %924 = vrot.lane.b32.xlu0 %v916, 19
        %v925 = vpop.permute.xlu0 %924
        %v926 = vsel %vm665, %v921, %v923
        %v927 = vsel %vm665, %v923, %v925
        %v931 = vsel %vm665, 0.0, %v921
        %v932 = vsel %vm672, %v927, 0.0
        %v933 = vld [vmem:[%s3] sm:$0xf]
        %936 = vrot.lane.b32.xlu0 %v931, 127
        %v937 = vpop.permute.xlu0 %936
        %938 = vrot.lane.b32.xlu0 %v926, 127
        %v939 = vpop.permute.xlu0 %938
        %940 = vrot.lane.b32.xlu0 %v932, 127
        %v941 = vpop.permute.xlu0 %940
        %v942 = vsel %vm371, %v937, %v939
        %v943 = vsel %vm371, %v939, %v941
        %947 = vrot.lane.b32.xlu0 %v931, 126
        %v948 = vpop.permute.xlu0 %947
        %949 = vrot.lane.b32.xlu0 %v926, 126
        %v950 = vpop.permute.xlu0 %949
        %951 = vrot.lane.b32.xlu0 %v932, 126
        %v952 = vpop.permute.xlu0 %951
        %v953 = vsel %vm383, %v948, %v950
        %v954 = vsel %vm383, %v950, %v952
        %958 = vrot.lane.b32.xlu0 %v931, 110
        %v959 = vpop.permute.xlu0 %958
        %960 = vrot.lane.b32.xlu0 %v926, 110
        %v961 = vpop.permute.xlu0 %960
        %962 = vrot.lane.b32.xlu0 %v932, 110
        %v963 = vpop.permute.xlu0 %962
        %v964 = vsel %vm395, %v959, %v961
        %v965 = vsel %vm395, %v961, %v963
        %969 = vrot.lane.b32.xlu0 %v931, 109
        %v970 = vpop.permute.xlu0 %969
        %971 = vrot.lane.b32.xlu0 %v926, 109
        %v972 = vpop.permute.xlu0 %971
        %973 = vrot.lane.b32.xlu0 %v932, 109
        %v974 = vpop.permute.xlu0 %973
        %v975 = vsel %vm407, %v970, %v972
        %v976 = vsel %vm407, %v972, %v974
        %980 = vrot.lane.b32.xlu0 %v931, 108
        %v981 = vpop.permute.xlu0 %980
        %982 = vrot.lane.b32.xlu0 %v926, 108
        %v983 = vpop.permute.xlu0 %982
        %984 = vrot.lane.b32.xlu0 %v932, 108
        %v985 = vpop.permute.xlu0 %984
        %v986 = vsel %vm419, %v981, %v983
        %v987 = vsel %vm419, %v983, %v985
        %991 = vrot.lane.b32.xlu0 %v931, 92
        %v992 = vpop.permute.xlu0 %991
        %993 = vrot.lane.b32.xlu0 %v926, 92
        %v994 = vpop.permute.xlu0 %993
        %995 = vrot.lane.b32.xlu0 %v932, 92
        %v996 = vpop.permute.xlu0 %995
        %v997 = vsel %vm431, %v992, %v994
        %v998 = vsel %vm431, %v994, %v996
        %1002 = vrot.lane.b32.xlu0 %v931, 91
        %v1003 = vpop.permute.xlu0 %1002
        %1004 = vrot.lane.b32.xlu0 %v926, 91
        %v1005 = vpop.permute.xlu0 %1004
        %1006 = vrot.lane.b32.xlu0 %v932, 91
        %v1007 = vpop.permute.xlu0 %1006
        %v1008 = vsel %vm443, %v1003, %v1005
        %v1009 = vsel %vm443, %v1005, %v1007
        %1013 = vrot.lane.b32.xlu0 %v931, 90
        %v1014 = vpop.permute.xlu0 %1013
        %1015 = vrot.lane.b32.xlu0 %v926, 90
        %v1016 = vpop.permute.xlu0 %1015
        %1017 = vrot.lane.b32.xlu0 %v932, 90
        %v1018 = vpop.permute.xlu0 %1017
        %v1019 = vsel %vm455, %v1014, %v1016
        %v1020 = vsel %vm455, %v1016, %v1018
        %v1025 = vsel %vm769, %v933, 0
        %1027 = vmatprep.subr.mxu0 %v926
        %1028 = vmatpush1.msra.mxu0 %v931
        %1029 = vmatprep.subr.mxu0 %v943
        %1030 = vmatpush1.msra.mxu0 %v942
        %1031 = vmatprep.subr.mxu0 %v954
        %1032 = vmatpush1.msra.mxu0 %v953
        %1033 = vmatprep.subr.mxu0 %v965
        %1034 = vmatpush1.msra.mxu0 %v964
        %1035 = vmatprep.subr.mxu0 %v976
        %1036 = vmatpush1.msra.mxu0 %v975
        %1037 = vmatprep.subr.mxu0 %v987
        %1038 = vmatpush1.msra.mxu0 %v986
        %1039 = vmatprep.subr.mxu0 %v998
        %1040 = vmatpush1.msra.mxu0 %v997
        %1041 = vmatprep.subr.mxu0 %v1009
        %1042 = vmatpush1.msra.mxu0 %v1008
        %1043 = vmatprep.subr.mxu0 %v1020
        %1044 = vmatpush1.msra.mxu0 %v1019
        %1045 = vmatprep.subr.mxu0 0.0
        %1046 = vmatpush1.msra.mxu0 0.0
        %1047 = vmatprep.subr.mxu0 0.0
        %1048 = vmatpush1.msra.mxu0 0.0
        %1049 = vmatprep.subr.mxu0 0.0
        %1050 = vmatpush1.msra.mxu0 0.0
        %1051 = vmatprep.subr.mxu0 0.0
        %1052 = vmatpush1.msra.mxu0 0.0
        %1053 = vmatprep.subr.mxu0 0.0
        %1054 = vmatpush1.msra.mxu0 0.0
        %1055 = vmatprep.subr.mxu0 0.0
        %1056 = vmatpush1.msra.mxu0 0.0
        %1057 = vmatprep.subr.mxu0 0.0
        %1058 = vmatpush1.msra.mxu0 0.0
        %1059 = vmatprep.subr.mxu0 0.0
        %1060 = vmatpush1.msra.mxu0 0.0
        %1061 = vmatprep.subr.mxu0 0.0
        %1062 = vmatpush1.msra.mxu0 0.0
        %1063 = vmatprep.subr.mxu0 0.0
        %1064 = vmatpush1.msra.mxu0 0.0
        %1065 = vmatprep.subr.mxu0 0.0
        %1066 = vmatpush1.msra.mxu0 0.0
        %1067 = vmatprep.subr.mxu0 0.0
        %1068 = vmatpush1.msra.mxu0 0.0
        %1069 = vmatprep.subr.mxu0 0.0
        %1070 = vmatpush1.msra.mxu0 0.0
        %1071 = vmatprep.subr.mxu0 0.0
        %1072 = vmatpush1.msra.mxu0 0.0
        %1073 = vmatprep.subr.mxu0 0.0
        %1074 = vmatpush1.msra.mxu0 0.0
        %1075 = vmatprep.subr.mxu0 0.0
        %1076 = vmatpush1.msra.mxu0 0.0
        %1077 = vmatprep.subr.mxu0 0.0
        %1078 = vmatpush1.msra.mxu0 0.0
        %1079 = vmatprep.subr.mxu0 0.0
        %1080 = vmatpush1.msra.mxu0 0.0
        %1081 = vmatprep.subr.mxu0 0.0
        %1082 = vmatpush1.msra.mxu0 0.0
        %1083 = vmatprep.subr.mxu0 0.0
        %1084 = vmatpush1.msra.mxu0 0.0
        %1085 = vmatprep.subr.mxu0 0.0
        %1086 = vmatpush1.msra.mxu0 0.0
        %1087 = vmatprep.subr.mxu0 0.0
        %1088 = vmatpush1.msra.mxu0 0.0
        %1089 = vmatprep.subr.mxu0 0.0
        %1090 = vmatpush1.msra.mxu0 0.0
        %1091 = vmatprep.mubr.f32.mxu0 0.0
        %1092 = vmatmul.mubr.f32.gmra.mrb[0].mxu0 %v1025
        %v1093 = vpop.f32.mrb[0].mxu0
        %v1094 = vadd.f32 0.0, %v1093
        %v1095 = vpop.f32.mrb[0].mxu0
        %v1096 = vadd.f32 0.0, %v1095
        %1097 = vdwg.mxu0
        %1098 = vmatprep.subr.mxu0 0.0
        %1099 = vmatpush1.msra.mxu0 %v932
        %1100 = vmatprep.subr.mxu0 0.0
        %1101 = vmatpush1.msra.mxu0 %v941
        %1102 = vmatprep.subr.mxu0 0.0
        %1103 = vmatpush1.msra.mxu0 %v952
        %1104 = vmatprep.subr.mxu0 0.0
        %1105 = vmatpush1.msra.mxu0 %v963
        %1106 = vmatprep.subr.mxu0 0.0
        %1107 = vmatpush1.msra.mxu0 %v974
        %1108 = vmatprep.subr.mxu0 0.0
        %1109 = vmatpush1.msra.mxu0 %v985
        %1110 = vmatprep.subr.mxu0 0.0
        %1111 = vmatpush1.msra.mxu0 %v996
        %1112 = vmatprep.subr.mxu0 0.0
        %1113 = vmatpush1.msra.mxu0 %v1007
        %1114 = vmatprep.subr.mxu0 0.0
        %1115 = vmatpush1.msra.mxu0 %v1018
        %1116 = vmatprep.subr.mxu0 0.0
        %1117 = vmatpush1.msra.mxu0 0.0
        %1118 = vmatprep.subr.mxu0 0.0
        %1119 = vmatpush1.msra.mxu0 0.0
        %1120 = vmatprep.subr.mxu0 0.0
        %1121 = vmatpush1.msra.mxu0 0.0
        %1122 = vmatprep.subr.mxu0 0.0
        %1123 = vmatpush1.msra.mxu0 0.0
        %1124 = vmatprep.subr.mxu0 0.0
        %1125 = vmatpush1.msra.mxu0 0.0
        %1126 = vmatprep.subr.mxu0 0.0
        %1127 = vmatpush1.msra.mxu0 0.0
        %1128 = vmatprep.subr.mxu0 0.0
        %1129 = vmatpush1.msra.mxu0 0.0
        %1130 = vmatprep.subr.mxu0 0.0
        %1131 = vmatpush1.msra.mxu0 0.0
        %1132 = vmatprep.subr.mxu0 0.0
        %1133 = vmatpush1.msra.mxu0 0.0
        %1134 = vmatprep.subr.mxu0 0.0
        %1135 = vmatpush1.msra.mxu0 0.0
        %1136 = vmatprep.subr.mxu0 0.0
        %1137 = vmatpush1.msra.mxu0 0.0
        %1138 = vmatprep.subr.mxu0 0.0
        %1139 = vmatpush1.msra.mxu0 0.0
        %1140 = vmatprep.subr.mxu0 0.0
        %1141 = vmatpush1.msra.mxu0 0.0
        %1142 = vmatprep.subr.mxu0 0.0
        %1143 = vmatpush1.msra.mxu0 0.0
        %1144 = vmatprep.subr.mxu0 0.0
        %1145 = vmatpush1.msra.mxu0 0.0
        %1146 = vmatprep.subr.mxu0 0.0
        %1147 = vmatpush1.msra.mxu0 0.0
        %1148 = vmatprep.subr.mxu0 0.0
        %1149 = vmatpush1.msra.mxu0 0.0
        %1150 = vmatprep.subr.mxu0 0.0
        %1151 = vmatpush1.msra.mxu0 0.0
        %1152 = vmatprep.subr.mxu0 0.0
        %1153 = vmatpush1.msra.mxu0 0.0
        %1154 = vmatprep.subr.mxu0 0.0
        %1155 = vmatpush1.msra.mxu0 0.0
        %1156 = vmatprep.subr.mxu0 0.0
        %1157 = vmatpush1.msra.mxu0 0.0
        %1158 = vmatprep.subr.mxu0 0.0
        %1159 = vmatpush1.msra.mxu0 0.0
        %1160 = vmatprep.subr.mxu0 0.0
        %1161 = vmatpush1.msra.mxu0 0.0
        %1162 = vmatprep.mubr.f32.mxu0 0.0
        %1163 = vmatmul.mubr.f32.gmra.mrb[0].mxu0 %v1025
        %v1164 = vpop.f32.mrb[0].mxu0
        %v1165 = vadd.f32 0.0, %v1164
        %v1166 = vpop.f32.mrb[0].mxu0
        %1167 = vdwg.mxu0
        %1169 = vrot.lane.b32.xlu0 %v1094, 126
        %v1170 = vpop.permute.xlu0 %1169
        %1172 = vrot.lane.b32.xlu0 %v1094, 124
        %v1173 = vpop.permute.xlu0 %1172
        %1175 = vrot.lane.b32.xlu0 %v1094, 122
        %v1176 = vpop.permute.xlu0 %1175
        %1178 = vrot.lane.b32.xlu0 %v1094, 120
        %v1179 = vpop.permute.xlu0 %1178
        %1181 = vrot.lane.b32.xlu0 %v1094, 118
        %v1182 = vpop.permute.xlu0 %1181
        %1184 = vrot.lane.b32.xlu0 %v1094, 116
        %v1185 = vpop.permute.xlu0 %1184
        %1188 = vrot.lane.b32.xlu0 %v1094, 114
        %v1189 = vpop.permute.xlu0 %1188
        %1190 = vrot.lane.b32.xlu0 %v1096, 114
        %v1191 = vpop.permute.xlu0 %1190
        %vm1192 = vcmask 932864
        %v1193 = vsel %vm1192, %v1189, %v1191
        %1195 = vrot.lane.b32.xlu0 %v1096, 112
        %v1196 = vpop.permute.xlu0 %1195
        %1198 = vrot.lane.b32.xlu0 %v1096, 110
        %v1199 = vpop.permute.xlu0 %1198
        %1201 = vrot.lane.b32.xlu0 %v1096, 108
        %v1202 = vpop.permute.xlu0 %1201
        %1204 = vrot.lane.b32.xlu0 %v1096, 106
        %v1205 = vpop.permute.xlu0 %1204
        %1207 = vrot.lane.b32.xlu0 %v1096, 104
        %v1208 = vpop.permute.xlu0 %1207
        %1210 = vrot.lane.b32.xlu0 %v1096, 102
        %v1211 = vpop.permute.xlu0 %1210
        %1214 = vrot.lane.b32.xlu0 %v1096, 100
        %v1215 = vpop.permute.xlu0 %1214
        %1216 = vrot.lane.b32.xlu0 %v1165, 100
        %v1217 = vpop.permute.xlu0 %1216
        %vm1218 = vcmask 818176
        %v1219 = vsel %vm1218, %v1215, %v1217
        %1221 = vrot.lane.b32.xlu0 %v1165, 98
        %v1222 = vpop.permute.xlu0 %1221
        %vm1224 = vcmask 130048
        %v1225 = vsel %vm1224, %v1094, %v1170
        %vm1226 = vcmask 261120
        %v1227 = vsel %vm1226, %v1225, %v1173
        %vm1228 = vcmask 392192
        %v1229 = vsel %vm1228, %v1227, %v1176
        %vm1230 = vcmask 523264
        %v1231 = vsel %vm1230, %v1229, %v1179
        %vm1232 = vcmask 654336
        %v1233 = vsel %vm1232, %v1231, %v1182
        %vm1234 = vcmask 785408
        %v1235 = vsel %vm1234, %v1233, %v1185
        %vm1236 = vcmask 916480
        %v1237 = vsel %vm1236, %v1235, %v1193
        %v1238 = vsel %vm1224, %v1196, %v1199
        %v1239 = vsel %vm1226, %v1238, %v1202
        %v1240 = vsel %vm1228, %v1239, %v1205
        %v1241 = vsel %vm1230, %v1240, %v1208
        %v1242 = vsel %vm1232, %v1241, %v1211
        %v1243 = vsel %vm1234, %v1242, %v1219
        %v1244 = vsel %vm1236, %v1243, %v1222
        %v1245 = vld [vmem:[#allocation8] sm:$0xff]
        %v1246 = vld [vmem:[#allocation8 + $0x8] sm:$0xff]
        %v1247 = vld [vmem:[#allocation8 + $0x10] sm:$0xff]
        %v1248 = vld [vmem:[#allocation8 + $0x18] sm:$0xff]
        %v1249 = vld [vmem:[#allocation8 + $0x20] sm:$0xff]
        %v1250 = vld [vmem:[#allocation8 + $0x28] sm:$0xff]
        %v1251 = vld [vmem:[#allocation8 + $0x30] sm:$0xff]
        %v1252 = vld [vmem:[#allocation8 + $0x38] sm:$0xff]
        %v1253 = vld [vmem:[#allocation8 + $0x40] sm:$0xff]
        %v1254 = vld [vmem:[#allocation8 + $0x48] sm:$0xff]
        %v1255 = vld [vmem:[#allocation8 + $0x50] sm:$0xff]
        %v1256 = vld [vmem:[#allocation8 + $0x58] sm:$0xff]
        %v1257 = vld [vmem:[#allocation8 + $0x60] sm:$0xff]
        %v1258 = vld [vmem:[#allocation8 + $0x68] sm:$0xff]
        %v1259 = vld [vmem:[#allocation8 + $0x70] sm:$0xff]
        %v1260 = vld [vmem:[#allocation8 + $0x78] sm:$0xff]
        %v1261 = vld [vmem:[#allocation8 + $0x80] sm:$0xff]
        %v1262 = vld [vmem:[#allocation8 + $0x88] sm:$0xff]
        %v1263 = vld [vmem:[#allocation8 + $0x90] sm:$0xff]
        %v1264 = vld [vmem:[#allocation8 + $0x98] sm:$0xff]
        %v1265 = vld [vmem:[#allocation8 + $0xa0] sm:$0xff]
        %v1266 = vld [vmem:[#allocation8 + $0xa8] sm:$0xff]
        %v1267 = vld [vmem:[#allocation8 + $0xb0] sm:$0xff]
        %v1268 = vld [vmem:[#allocation8 + $0xb8] sm:$0xff]
        %v1269 = vld [vmem:[#allocation8 + $0xc0] sm:$0xff]
        %v1270 = vld [vmem:[#allocation8 + $0xc8] sm:$0xff]
        %v1271 = vld [vmem:[#allocation8 + $0xd0] sm:$0xff]
        %v1272 = vld [vmem:[#allocation8 + $0xd8] sm:$0xff]
        %v1273 = vld [vmem:[#allocation8 + $0xe0] sm:$0xff]
        %v1274 = vld [vmem:[#allocation8 + $0xe8] sm:$0xff]
        %v1275 = vld [vmem:[#allocation8 + $0xf0] sm:$0xff]
        %v1276 = vld [vmem:[#allocation8 + $0xf8] sm:$0xff]
        %v1277 = vld [vmem:[#allocation8 + $0x100] sm:$0xff]
        %v1278 = vld [vmem:[#allocation8 + $0x108] sm:$0xff]
        %v1279 = vld [vmem:[#allocation8 + $0x110] sm:$0xff]
        %v1280 = vld [vmem:[#allocation8 + $0x118] sm:$0xff]
        %v1281 = vld [vmem:[#allocation8 + $0x120] sm:$0xff]
        %v1282 = vld [vmem:[#allocation8 + $0x128] sm:$0xff]
        %v1283 = vld [vmem:[#allocation8 + $0x130] sm:$0xff]
        %v1284 = vld [vmem:[#allocation8 + $0x138] sm:$0xff]
        %v1285 = vld [vmem:[#allocation8 + $0x140] sm:$0xff]
        %v1286 = vld [vmem:[#allocation8 + $0x148] sm:$0xff]
        %v1287 = vld [vmem:[#allocation8 + $0x150] sm:$0xff]
        %v1288 = vld [vmem:[#allocation8 + $0x158] sm:$0xff]
        %v1289 = vld [vmem:[#allocation8 + $0x160] sm:$0xff]
        %v1290 = vld [vmem:[#allocation8 + $0x168] sm:$0xff]
        %v1291 = vld [vmem:[#allocation8 + $0x170] sm:$0xff]
        %v1292 = vld [vmem:[#allocation8 + $0x178] sm:$0xff]
        %v1293 = vld [vmem:[#allocation8 + $0x180] sm:$0xff]
        %v1294 = vld [vmem:[#allocation8 + $0x188] sm:$0xff]
        %v1295 = vld [vmem:[#allocation8 + $0x190] sm:$0xff]
        %v1296 = vld [vmem:[#allocation8 + $0x198] sm:$0xff]
        %v1297 = vld [vmem:[#allocation8 + $0x1a0] sm:$0xff]
        %v1298 = vld [vmem:[#allocation8 + $0x1a8] sm:$0xff]
        %v1299 = vld [vmem:[#allocation8 + $0x1b0] sm:$0xff]
        %v1300 = vld [vmem:[#allocation8 + $0x1b8] sm:$0xff]
        %v1301 = vld [vmem:[#allocation8 + $0x1c0] sm:$0xff]
        %v1302 = vld [vmem:[#allocation8 + $0x1c8] sm:$0xff]
        %v1303 = vld [vmem:[#allocation8 + $0x1d0] sm:$0xff]
        %v1304 = vld [vmem:[#allocation8 + $0x1d8] sm:$0xff]
        %v1305 = vld [vmem:[#allocation8 + $0x1e0] sm:$0xff]
        %v1306 = vld [vmem:[#allocation8 + $0x1e8] sm:$0xff]
        %v1307 = vld [vmem:[#allocation8 + $0x1f0] sm:$0xff]
        %v1308 = vld [vmem:[#allocation8 + $0x1f8] sm:$0xff]
        %1309 = vmatprep.subr.mxu0 %v1246
        %1310 = vmatpush1.msra.mxu0 %v1245
        %1311 = vmatprep.subr.mxu0 %v1248
        %1312 = vmatpush1.msra.mxu0 %v1247
        %1313 = vmatprep.subr.mxu0 %v1250
        %1314 = vmatpush1.msra.mxu0 %v1249
        %1315 = vmatprep.subr.mxu0 %v1252
        %1316 = vmatpush1.msra.mxu0 %v1251
        %1317 = vmatprep.subr.mxu0 %v1254
        %1318 = vmatpush1.msra.mxu0 %v1253
        %1319 = vmatprep.subr.mxu0 %v1256
        %1320 = vmatpush1.msra.mxu0 %v1255
        %1321 = vmatprep.subr.mxu0 %v1258
        %1322 = vmatpush1.msra.mxu0 %v1257
        %1323 = vmatprep.subr.mxu0 %v1260
        %1324 = vmatpush1.msra.mxu0 %v1259
        %1325 = vmatprep.subr.mxu0 %v1262
        %1326 = vmatpush1.msra.mxu0 %v1261
        %1327 = vmatprep.subr.mxu0 %v1264
        %1328 = vmatpush1.msra.mxu0 %v1263
        %1329 = vmatprep.subr.mxu0 %v1266
        %1330 = vmatpush1.msra.mxu0 %v1265
        %1331 = vmatprep.subr.mxu0 %v1268
        %1332 = vmatpush1.msra.mxu0 %v1267
        %1333 = vmatprep.subr.mxu0 %v1270
        %1334 = vmatpush1.msra.mxu0 %v1269
        %1335 = vmatprep.subr.mxu0 %v1272
        %1336 = vmatpush1.msra.mxu0 %v1271
        %1337 = vmatprep.subr.mxu0 %v1274
        %1338 = vmatpush1.msra.mxu0 %v1273
        %1339 = vmatprep.subr.mxu0 %v1276
        %1340 = vmatpush1.msra.mxu0 %v1275
        %1341 = vmatprep.subr.mxu0 %v1278
        %1342 = vmatpush1.msra.mxu0 %v1277
        %1343 = vmatprep.subr.mxu0 %v1280
        %1344 = vmatpush1.msra.mxu0 %v1279
        %1345 = vmatprep.subr.mxu0 %v1282
        %1346 = vmatpush1.msra.mxu0 %v1281
        %1347 = vmatprep.subr.mxu0 %v1284
        %1348 = vmatpush1.msra.mxu0 %v1283
        %1349 = vmatprep.subr.mxu0 %v1286
        %1350 = vmatpush1.msra.mxu0 %v1285
        %1351 = vmatprep.subr.mxu0 %v1288
        %1352 = vmatpush1.msra.mxu0 %v1287
        %1353 = vmatprep.subr.mxu0 %v1290
        %1354 = vmatpush1.msra.mxu0 %v1289
        %1355 = vmatprep.subr.mxu0 %v1292
        %1356 = vmatpush1.msra.mxu0 %v1291
        %1357 = vmatprep.subr.mxu0 %v1294
        %1358 = vmatpush1.msra.mxu0 %v1293
        %1359 = vmatprep.subr.mxu0 %v1296
        %1360 = vmatpush1.msra.mxu0 %v1295
        %1361 = vmatprep.subr.mxu0 %v1298
        %1362 = vmatpush1.msra.mxu0 %v1297
        %1363 = vmatprep.subr.mxu0 %v1300
        %1364 = vmatpush1.msra.mxu0 %v1299
        %1365 = vmatprep.subr.mxu0 %v1302
        %1366 = vmatpush1.msra.mxu0 %v1301
        %1367 = vmatprep.subr.mxu0 %v1304
        %1368 = vmatpush1.msra.mxu0 %v1303
        %1369 = vmatprep.subr.mxu0 %v1306
        %1370 = vmatpush1.msra.mxu0 %v1305
        %1371 = vmatprep.subr.mxu0 %v1308
        %1372 = vmatpush1.msra.mxu0 %v1307
        %1373 = vmatprep.mubr.f32.mxu0 %v1244
        %1374 = vmatmul.mubr.f32.gmra.mrb[0].mxu0 %v1237
        %v1375 = vpop.f32.mrb[0].mxu0
        %v1376 = vadd.f32 0.0, %v1375
        %v1377 = vpop.f32.mrb[0].mxu0
        %v1378 = vadd.f32 0.0, %v1377
        %1379 = vdwg.mxu0
        %v1380 = vsel %vm470, %v1237, 0.0
        %v1381 = vrot.slane %v1380, 4
        %v1382 = vadd.f32 %v1380, %v1381
        %v1383 = vrot.slane %v1382, 2
        %v1384 = vadd.f32 %v1382, %v1383
        %v1385 = vrot.slane %v1384, 1
        %v1386 = vadd.f32 %v1384, %v1385
        %v1387 = vsel %vm470, %v1244, 0.0
        %v1388 = vrot.slane %v1387, 4
        %v1389 = vadd.f32 %v1387, %v1388
        %v1390 = vrot.slane %v1389, 2
        %v1391 = vadd.f32 %v1389, %v1390
        %v1392 = vrot.slane %v1391, 1
        %v1393 = vadd.f32 %v1391, %v1392
        %v1394 = vrcp.pop 4.0
        %v1395 = vmul.f32 %v1386, %v1394
        %v1396 = vmul.f32 %v1393, %v1394
        %v1397 = vsub.f32 %v1237, %v1376
        %v1398 = vsub.f32 %v1244, %v1378
        %v1399 = vmax.f32 %v1397, 0.0
        %v1400 = vmax.f32 %v1398, 0.0
        %v1401 = vand.u32 2147483647, %v1397
        %v1402 = vand.u32 2147483647, %v1398
        %v1403 = vsub.f32 0.0, %v1401
        %v1404 = vsub.f32 0.0, %v1402
        %v1405 = vmul.f32 %v1403, 1.442695
        %v1406 = vpow.pop %v1405
        %v1407 = vmul.f32 %v1404, 1.442695
        %v1408 = vpow.pop %v1407
        %v1409 = vadd.f32 %v1406, 1.0
        %v1410 = vlog2.pop %v1409
        %v1411 = vmul.f32 %v1410, 0.6931472
        %v1412 = vmul.f32 -0.5, %v1406
        %v1413 = vadd.f32 %v1412, 1.0
        %v1414 = vmul.f32 %v1413, %v1406
        %v1415 = vand.u32 2147483647, %v1406
        %vm1416 = vcmp.lt.f32.partialorder %v1415, 0.0004427343
        %v1417 = vsel %vm1416, %v1414, %v1411
        %v1418 = vadd.f32 %v1408, 1.0
        %v1419 = vlog2.pop %v1418
        %v1420 = vmul.f32 %v1419, 0.6931472
        %v1421 = vmul.f32 -0.5, %v1408
        %v1422 = vadd.f32 %v1421, 1.0
        %v1423 = vmul.f32 %v1422, %v1408
        %v1424 = vand.u32 2147483647, %v1408
        %vm1425 = vcmp.lt.f32.partialorder %v1424, 0.0004427343
        %v1426 = vsel %vm1425, %v1423, %v1420
        %v1427 = vadd.f32 %v1399, %v1417
        %v1428 = vadd.f32 %v1400, %v1426
        %v1429 = vsub.f32 %v1237, %v1395
        %v1430 = vsub.f32 %v1244, %v1396
        %v1431 = vmax.f32 %v1429, 0.0
        %v1432 = vmax.f32 %v1430, 0.0
        %v1433 = vand.u32 2147483647, %v1429
        %v1434 = vand.u32 2147483647, %v1430
        %v1435 = vsub.f32 0.0, %v1433
        %v1436 = vsub.f32 0.0, %v1434
        %v1437 = vmul.f32 %v1435, 1.442695
        %v1438 = vpow.pop %v1437
        %v1439 = vmul.f32 %v1436, 1.442695
        %v1440 = vpow.pop %v1439
        %v1441 = vadd.f32 %v1438, 1.0
        %v1442 = vlog2.pop %v1441
        %v1443 = vmul.f32 %v1442, 0.6931472
        %v1444 = vmul.f32 -0.5, %v1438
        %v1445 = vadd.f32 %v1444, 1.0
        %v1446 = vmul.f32 %v1445, %v1438
        %v1447 = vand.u32 2147483647, %v1438
        %vm1448 = vcmp.lt.f32.partialorder %v1447, 0.0004427343
        %v1449 = vsel %vm1448, %v1446, %v1443
        %v1450 = vadd.f32 %v1440, 1.0
        %v1451 = vlog2.pop %v1450
        %v1452 = vmul.f32 %v1451, 0.6931472
        %v1453 = vmul.f32 -0.5, %v1440
        %v1454 = vadd.f32 %v1453, 1.0
        %v1455 = vmul.f32 %v1454, %v1440
        %v1456 = vand.u32 2147483647, %v1440
        %vm1457 = vcmp.lt.f32.partialorder %v1456, 0.0004427343
        %v1458 = vsel %vm1457, %v1455, %v1452
        %v1459 = vadd.f32 %v1431, %v1449
        %v1460 = vadd.f32 %v1432, %v1458
        %v1461 = vmul.f32 %v1427, %v1459
        %v1462 = vmul.f32 %v1428, %v1460
        %v1463 = vsel %vm470, %v1461, -inf
        %v1464 = vrot.slane %v1463, 4
        %v1465 = vmax.f32 %v1463, %v1464
        %v1466 = vrot.slane %v1465, 2
        %v1467 = vmax.f32 %v1465, %v1466
        %v1468 = vrot.slane %v1467, 1
        %v1469 = vmax.f32 %v1467, %v1468
        %v1470 = vsel %vm470, %v1462, -inf
        %v1471 = vrot.slane %v1470, 4
        %v1472 = vmax.f32 %v1470, %v1471
        %v1473 = vrot.slane %v1472, 2
        %v1474 = vmax.f32 %v1472, %v1473
        %v1475 = vrot.slane %v1474, 1
        %v1476 = vmax.f32 %v1474, %v1475
        %v1479 = vcombine.low %v1469, %v1476
        %v1481 = vunpack.c.l.s4 1966171168
        %v1482 = vunpack.c.0.s8 %v1481
        %v1483 = vlaneseq
        %v1484 = vshrl.u32 %v1483, 7
        %v1485 = vsub.s32 %v1482, %v1484
        %v1486 = vrot.slane %v1479, %v1485
        %v1488 = vunpack.c.l.s4 1966171168
        %v1489 = vunpack.c.0.s8 %v1488
        %v1490 = vlaneseq
        %v1491 = vshrl.u32 %v1490, 7
        %v1492 = vsub.s32 %v1489, %v1491
        %v1493 = vrot.slane %v1486, %v1492
        %v1495 = vlaneseq
        %vm1496 = vcmp.ge.s32.totalorder %v1495, 0
        %vm1497 = vcmp.lt.s32.totalorder %v1495, 256
        %vm1498 = vmand %vm1496, %vm1497
        %1499 = vst.msk [vmem:[%s345] sm:$0x3] %vm1498, %v1493
        %v1500 = vmax.f32 %v931, 0.0
        %v1501 = vmax.f32 %v926, 0.0
        %v1502 = vmax.f32 %v932, 0.0
        %1503 = vst [vmem:[%s338] sm:$0xff] %v1500
        %1504 = vst [vmem:[%s338 + $0x8] sm:$0xff] %v1501
        %vm1505 = vcmask 556032
        %1506 = vst.msk [vmem:[%s338 + $0x10] sm:$0xff] %vm1505, %v1502
        %s1507 = sand.u32 %s169, 1
        %s1508 = scalar_lea.sflag [#allocation4], %s1507
        %s1509 = sand.u32 %s169, 1
        %s1510 = smul.addr %s1509, 24
        %s1511 = scalar_lea.vmem [#allocation10], %s1510
        %s1512 = sand.u32 %s195, 1
        %s1513 = scalar_lea.sflag [#allocation12], %s1512
        %s1514 = sand.u32 %s195, 1
        %s1515 = smul.addr %s1514, 2
        %s1516 = scalar_lea.vmem [#allocation11], %s1515
        // Predicated region
        $region61: #{tpu_custom_call.1} parent=43 // pred_check
          %p1517 = pneg %p179
        $region62: #{tpu_custom_call.1} parent=43 // pred_check_branch
          %1519 = sbr.rel (%p1517) target = $region64
        $region63: #{tpu_custom_call.1} parent=43 // pred_region
          %s1521 = ssub.s32 384, 384
          %1522 = vsyncadd %s1508, %s1521
          %s1523 = smul.addr %s30, 3
          %s1524 = smul.addr %s1523, 128
          %s1525 = scalar_lea.hbm %s6, %s1524
          %s1527 = sshll.u32 %s1511, 4
          %s1528 = int_to_ptr.vmem [resolvable:$true] %s1527
          %1530 = dma.vmem_to_hbm [thread:$0]  %s1528, 384, %s1525, %s1508
        $region64: #{tpu_custom_call.1} parent=43 // pred_fallthru
          _
        // Predicated region
        $region65: #{tpu_custom_call.1} parent=43 // pred_check
          %p1531 = pneg %p205
        $region66: #{tpu_custom_call.1} parent=43 // pred_check_branch
          %1533 = sbr.rel (%p1531) target = $region68
        $region67: #{tpu_custom_call.1} parent=43 // pred_region
          %s1535 = ssub.s32 32, 32
          %1536 = vsyncadd %s1513, %s1535
          %s1537 = smul.addr %s30, 2
          %s1538 = smul.addr %s1537, 16
          %s1539 = scalar_lea.hbm %s7, %s1538
          %s1541 = sshll.u32 %s1516, 4
          %s1542 = int_to_ptr.vmem [resolvable:$true] %s1541
          %1544 = dma.vmem_to_hbm [thread:$0]  %s1542, 32, %s1539, %s1513
        $region68: #{tpu_custom_call.1} parent=43 // pred_fallthru
          _
      $region44: #{tpu_custom_call.1} parent=5 // pred_fallthru
        _
      %p1545 = scmp.le.s32.totalorder 2, %s25
      // Predicated region
      $region69: #{tpu_custom_call.1} parent=5 // pred_check
        %p1546 = pneg %p1545
      $region70: #{tpu_custom_call.1} parent=5 // pred_check_branch
        %1548 = sbr.rel (%p1546) target = $region72
      $region71: #{tpu_custom_call.1} parent=5 // pred_region
        %s1549 = ssub.s32 %s25, 2
        // Predicated region
        $region73: #{tpu_custom_call.1} parent=71 // pred_check
          %p1550 = pneg %p185
        $region74: #{tpu_custom_call.1} parent=71 // pred_check_branch
          %1552 = sbr.rel (%p1550) target = $region76
        $region75: #{tpu_custom_call.1} parent=71 // pred_region
          %s1553 = sand.u32 %s170, 1
          %s1554 = scalar_lea.sflag [#allocation4], %s1553
          %s1555 = sand.u32 %s170, 1
          %s1556 = smul.addr %s1555, 24
          %s1557 = scalar_lea.vmem [#allocation10], %s1556
          %1558 = dma.done %s1554, 384
        $region76: #{tpu_custom_call.1} parent=71 // pred_fallthru
          _
        // Predicated region
        $region77: #{tpu_custom_call.1} parent=71 // pred_check
          %p1559 = pneg %p211
        $region78: #{tpu_custom_call.1} parent=71 // pred_check_branch
          %1561 = sbr.rel (%p1559) target = $region80
        $region79: #{tpu_custom_call.1} parent=71 // pred_region
          %s1562 = sand.u32 %s196, 1
          %s1563 = scalar_lea.sflag [#allocation12], %s1562
          %s1564 = sand.u32 %s196, 1
          %s1565 = smul.addr %s1564, 2
          %s1566 = scalar_lea.vmem [#allocation11], %s1565
          %1567 = dma.done %s1563, 32
        $region80: #{tpu_custom_call.1} parent=71 // pred_fallthru
          _
      $region72: #{tpu_custom_call.1} parent=5 // pred_fallthru
        _
    $region6: #{tpu_custom_call.1} parent=1 // loop_footer
      %s29 = sadd.s32 1, %s25
    $region7: #{tpu_custom_call.1} parent=1 // loop_footer_branch
      %24 = sbr.rel target = $region3
    $region8: #{tpu_custom_call.1} parent=1 // loop_exit
      _
    %1568 = vsyncpa [#allocation3], 1
    %s1569 = scalar_lea.sflag [#allocation3], 1
    %1570 = vsyncpa %s1569, 1
    %1571 = vsyncpa [#allocation6], 1
    %1572 = vsyncpa [#allocation9], 1
    %1573 = vsyncpa [#allocation4], 1
    %s1574 = scalar_lea.sflag [#allocation4], 1
    %1575 = vsyncpa %s1574, 1
    %1576 = vsyncpa [#allocation12], 1
    %s1577 = scalar_lea.sflag [#allocation12], 1
    %1578 = vsyncpa %s1577, 1

</llo_original>
